<compile_context>
chip_gen: v7x
topology: tpu7x:2x2x1
jax: 0.10.0
libtpu: 0.0.40
codegen_flags: <defaults>
</compile_context>

<pallas_src>
import math

import numpy as np
import jax
import jax.numpy as jnp
from jax import lax
from jax.experimental import pallas as pl
from jax.experimental.pallas import tpu as pltpu

# ---------------------------------------------------------------------------
# Static sizes (small, TPU-lane-friendly versions of the module defaults).
# ---------------------------------------------------------------------------
F = 128            # feature_dim
H = 128            # hidden_dim
V = 128            # visual_dim
H2 = H // 2        # diffusion_net hidden
NH = 8             # attention heads
HD = F // NH       # head dim
N = 8              # fixed graph-node capacity for this synthetic demo
NN = N * N         # ordered node pairs
GOAL_IN = 1000     # goal_projection input dim (as in the module)
GP = 1024          # goal dim zero-padded to a lane multiple
B = 2              # batch size
RK_STEPS = 4       # fixed-step RK4 steps per ODE solve
ALPHA = 0.7        # EMA merge coefficient (matches the module)
MAX_EDGE_DIST = 5.0
_EPS = 1e-5
_VMEM_LIMIT = 16 * 1024 * 1024


def _mm(a, b):
    return jnp.dot(a, b, preferred_element_type=jnp.float32)


def _ln(x):
    """LayerNorm with init-time affine params (gamma=1, beta=0), eps=1e-5."""
    mu = jnp.mean(x, axis=-1, keepdims=True)
    var = jnp.mean((x - mu) ** 2, axis=-1, keepdims=True)
    return (x - mu) * lax.rsqrt(var + _EPS)


def _vmem():
    return pl.BlockSpec(memory_space=pltpu.MemorySpace.VMEM)


def _smem():
    return pl.BlockSpec(memory_space=pltpu.MemorySpace.SMEM)


# ---------------------------------------------------------------------------
# Kernel 1 (prologue): all per-observation encoders for the whole batch.
#   feature_encoder, context_encoder (pre-multiplied into temporal_dynamics),
#   query_net (pre-projected by the attention Wq) and goal_projection
#   (pre-multiplied into the path_scorer first layer).
# ---------------------------------------------------------------------------
def _prologue_kernel(obs, goal, encW1, encb1, feW2, feb2, qnW2, qnb2,
                     gpW, gpb, tW1b, tb1, atWq, atbq, psW1b, psb1,
                     obsf_ref, ctxtd_ref, qproj_ref, pgps_ref):
    x = obs[...]
    z = _mm(x, encW1[...]) + encb1[...]                  # (B, 3H): [fe | ce | qn]
    # feature_encoder: Linear -> LN -> ReLU -> Linear -> LN
    a1 = jnp.maximum(_ln(z[:, :H]), 0.0)
    obsf_ref[...] = _ln(_mm(a1, feW2[...]) + feb2[...])
    # context_encoder: Linear -> LN ; then hoist ctx @ td_W1b + td_b1 out of RK4
    ctx = _ln(z[:, H:2 * H])
    ctxtd_ref[...] = _mm(ctx, tW1b[...]) + tb1[...]
    # query_net: Linear -> ReLU -> Linear ; then attention q-projection
    qh = jnp.maximum(z[:, 2 * H:], 0.0)
    q = _mm(qh, qnW2[...]) + qnb2[...]
    qproj_ref[...] = _mm(q, atWq[...]) + atbq[...]
    # goal_projection ; then path_scorer first-layer goal half
    pg = _mm(goal[...], gpW[...]) + gpb[...]
    pgps_ref[...] = _mm(pg, psW1b[...]) + psb1[...]


def run_prologue(obs, goal_pad, params, const):
    ins = (obs, goal_pad, const['enc_W1'], const['enc_b1'],
           params['fe_W2'], params['fe_b2'], params['qn_W2'], params['qn_b2'],
           params['gp_W'], params['gp_b'], params['td_W1b'], params['td_b1'],
           params['at_Wq'], params['at_bq'], params['ps_W1b'], params['ps_b1'])
    return pl.pallas_call(
        _prologue_kernel,
        out_shape=(jax.ShapeDtypeStruct((B, F), jnp.float32),
                   jax.ShapeDtypeStruct((B, H), jnp.float32),
                   jax.ShapeDtypeStruct((B, F), jnp.float32),
                   jax.ShapeDtypeStruct((B, H), jnp.float32)),
        in_specs=[_vmem()] * len(ins),
        out_specs=(_vmem(), _vmem(), _vmem(), _vmem()),
        compiler_params=pltpu.CompilerParams(vmem_limit_bytes=_VMEM_LIMIT),
    )(*ins)


# ---------------------------------------------------------------------------
# Shared traced helper: edge_predictor over all N*N ordered pairs in one shot.
# rep_i / rep_j are (N*N, N) selection matrices so the whole pre-activation is
# built with two M=N*N matmuls (no per-row unroll, no reshapes/transposes).
# ---------------------------------------------------------------------------
def _edge_update(h, Cp, W1a, W1b, b1, W2, b2, W3, b3,
                 rep_i, rep_j, rep_iT, rep_jT, dmask, dmaskT):
    A = _mm(h, W1a)                            # feat_i part     (N, H)
    Bm = _mm(h, W1b)                           # feat_j part     (N, H)
    left = _mm(rep_i, A - Cp)                  # (N*N, H): (A - Cp)[i]
    right = _mm(rep_j, Bm + Cp)                # (N*N, H): (Bm + Cp)[j]
    z1 = jnp.maximum(left + right + b1, 0.0)
    z2 = jnp.maximum(_mm(z1, W2) + b2, 0.0)    # (N*N, 64)
    probs = jax.nn.sigmoid(_mm(z2, W3) + b3)   # (N*N, 1)
    # scatter pair probs back to (N, N) and its transpose via selector matmuls
    pm = _mm(rep_iT, probs * rep_j)            # pm[i, j]  = probs[i*N + j]
    pmT = _mm(rep_jT, probs * rep_i)           # pmT       = pm.T
    selU = dmask * (pm > 0.5).astype(jnp.float32)     # upper-tri & dist<5 & prob>0.5
    selL = dmaskT * (pmT > 0.5).astype(jnp.float32)
    return selU * pm + selL * pmT              # symmetric edge_attr (prob per direction)


# ---------------------------------------------------------------------------
# Kernel 2: edge initialisation (used once when the graph state is created).
# ---------------------------------------------------------------------------
def _edge_init_kernel(nodes, ep_Cpos, epW1a, epW1b, epb1, epW2, epb2, epW3, epb3,
                      rep_i, rep_j, rep_iT, rep_jT, dmask, dmaskT, eattr_out):
    eattr_out[...] = _edge_update(
        nodes[...], ep_Cpos[...], epW1a[...], epW1b[...], epb1[...], epW2[...],
        epb2[...], epW3[...], epb3[...], rep_i[...], rep_j[...], rep_iT[...],
        rep_jT[...], dmask[...], dmaskT[...])


def run_edge_init(nodes, params, const):
    ins = (nodes, const['ep_Cpos'], params['ep_W1a'], params['ep_W1b'],
           params['ep_b1'], params['ep_W2'], params['ep_b2'], params['ep_W3'],
           params['ep_b3'], const['rep_i'], const['rep_j'], const['rep_iT'],
           const['rep_jT'], const['dist_mask'], const['dist_maskT'])
    return pl.pallas_call(
        _edge_init_kernel,
        out_shape=jax.ShapeDtypeStruct((N, N), jnp.float32),
        in_specs=[_vmem()] * len(ins),
        out_specs=_vmem(),
        compiler_params=pltpu.CompilerParams(vmem_limit_bytes=_VMEM_LIMIT),
    )(*ins)


# ---------------------------------------------------------------------------
# Kernel 3 (megakernel, one call per batch item):
#   Laplacian build -> RK4 ODE solve -> nearest-node EMA merge ->
#   edge_predictor update -> multi-head attention -> goal path scoring.
# All weights and graph state stay resident in VMEM for the whole step.
# ---------------------------------------------------------------------------
def _graph_step_kernel(
        nodes_in, eattr_in, ctx_td, obs_b, q_proj, pg_ps, onehot, dt_ref,
        ode_Wh, tW2, tb2, tW3, tb3, dW2, db1, db2,
        epW1a, epW1b, ep_Cpos, epb1, epW2, epb2, epW3, epb3,
        ewR, ewW1t, ewb1t, ewW2bd, ewb2,
        atWkv, atbkv, atWo, atbo, atG, atGT,
        psW1a, psW2, psb2, psW3, psb3,
        rep_i, rep_j, rep_iT, rep_jT, dmask, dmaskT,
        nodes_out, eattr_out, agg_out, attn_out, conf_out):
    h0 = nodes_in[...]
    eattr = eattr_in[...]
    dt = dt_ref[0, 0]

    # --- GraphLaplacian: L = I - D^{-1/2} (w(edge_attr)*A + I) D^{-1/2} ------
    row = lax.broadcasted_iota(jnp.int32, (N, N), 0)
    col = lax.broadcasted_iota(jnp.int32, (N, N), 1)
    eye = (row == col).astype(jnp.float32)
    am = (eattr > 0.0).astype(jnp.float32) * (1.0 - eye)
    # edge_weight_net (a scalar MLP) applied elementwise to the NxN attr matrix,
    # expressed as matmuls against precomputed expansion / block-diag matrices.
    e_exp = _mm(eattr, ewR[...])                                   # (N, 32N)
    hid = jnp.maximum(e_exp * ewW1t[...] + ewb1t[...], 0.0)
    w = jax.nn.sigmoid(_mm(hid, ewW2bd[...]) + ewb2[...])          # (N, N)
    Wm = w * am + eye                       # learned weights on edges + self-loops
    maskf = am + eye
    deg_c = jnp.sum(maskf, axis=0, keepdims=True)                  # unweighted degree
    deg_r = jnp.sum(maskf, axis=1, keepdims=True)
    dis_c = jnp.where(deg_c > 0.0, lax.rsqrt(deg_c), 0.0)
    dis_r = jnp.where(deg_r > 0.0, lax.rsqrt(deg_r), 0.0)
    L = eye - dis_r * Wm * dis_c

    # --- fixed-step RK4 solve of dh/dt = temporal(h,ctx) - diff(h)*(L @ h) ---
    # TODO(synk): torchdiffeq dopri5 (adaptive step / error control) has no
    # static-shape Pallas equivalent; fixed-step RK4 over [t0, t1] is used.
    ctx_part = ctx_td[...]            # ctx @ td_W1b + td_b1 (hoisted in prologue)
    w_comb = ode_Wh[...]              # [td_W1a | df_W1]  (F, H + H2)
    w2 = tW2[...]; b2_ = tb2[...]
    w3 = tW3[...]; b3_ = tb3[...]
    wd2 = dW2[...]; bd1 = db1[...]; bd2 = db2[...]

    def rhs(h):
        hz = _mm(h, w_comb)                                        # (N, H + H2)
        a1 = jnp.maximum(_ln(hz[:, :H] + ctx_part), 0.0)
        a2 = jnp.maximum(_ln(_mm(a1, w2) + b2_), 0.0)
        temporal = _mm(a2, w3) + b3_
        d1 = jnp.maximum(hz[:, H:] + bd1, 0.0)
        coeff = jax.nn.sigmoid(_mm(d1, wd2) + bd2)                 # (N, 1)
        return temporal - coeff * _mm(L, h)

    def rk_step(_, h):
        k1 = rhs(h)
        k2 = rhs(h + 0.5 * dt * k1)
        k3 = rhs(h + 0.5 * dt * k2)
        k4 = rhs(h + dt * k3)
        return h + (dt / 6.0) * (k1 + 2.0 * k2 + 2.0 * k3 + k4)

    h = lax.fori_loop(0, RK_STEPS, rk_step, h0, unroll=True)

    # --- find_or_create_node: nearest-node EMA merge (alpha = 0.7) -----------
    # TODO(synk): creating a brand-new node when min(dist) >= threshold (and
    # evicting the oldest node at capacity) needs dynamic shapes; not modeled.
    h = h + ALPHA * onehot[...] * (obs_b[...] - h)
    nodes_out[...] = h

    # --- update_edges via edge_predictor over all ordered pairs --------------
    eattr_out[...] = _edge_update(
        h, ep_Cpos[...], epW1a[...], epW1b[...], epb1[...], epW2[...], epb2[...],
        epW3[...], epb3[...], rep_i[...], rep_j[...], rep_iT[...], rep_jT[...],
        dmask[...], dmaskT[...])

    # --- 8-head attention: single (pre-projected) query vs. N node tokens ----
    kv = _mm(h, atWkv[...]) + atbkv[...]                           # (N, 2F)
    k = kv[:, :F]
    v = kv[:, F:]
    s = _mm(k * q_proj[...], atG[...]) * (1.0 / math.sqrt(HD))     # (N, NH)
    m = jnp.max(s, axis=0, keepdims=True)
    e = jnp.exp(s - m)
    p = e / jnp.sum(e, axis=0, keepdims=True)                      # softmax over nodes
    ctxv = jnp.sum(_mm(p, atGT[...]) * v, axis=0, keepdims=True)   # (1, F)
    agg_out[...] = _mm(ctxv, atWo[...]) + atbo[...]
    attn_out[...] = jnp.mean(p, axis=1, keepdims=True)             # head-averaged (N,1)

    # --- goal-conditioned path confidence ------------------------------------
    # TODO(synk): nn.Dropout(0.1) layers in path_scorer are eval-mode identity.
    pz1 = jnp.maximum(_mm(h, psW1a[...]) + pg_ps[...], 0.0)        # pg_ps = pg@W1b + b1
    pz2 = jnp.maximum(_mm(pz1, psW2[...]) + psb2[...], 0.0)
    scores = jax.nn.sigmoid(_mm(pz2, psW3[...]) + psb3[...])       # (N, 1)
    conf_out[...] = jnp.max(scores, axis=0, keepdims=True)         # (1, 1)


def run_graph_step(nodes, eattr, ctx_td, obs_b, q_proj, pg_ps, onehot, dt,
                   params, const):
    ins = (
        nodes, eattr, ctx_td, obs_b, q_proj, pg_ps, onehot, dt,
        const['ode_Wh'], params['td_W2'], params['td_b2'], params['td_W3'],
        params['td_b3'], params['df_W2'], params['df_b1'], params['df_b2'],
        params['ep_W1a'], params['ep_W1b'], const['ep_Cpos'], params['ep_b1'],
        params['ep_W2'], params['ep_b2'], params['ep_W3'], params['ep_b3'],
        const['ew_R'], const['ew_W1t'], const['ew_b1t'], const['ew_W2bd'],
        params['ew_b2'],
        const['at_Wkv'], const['at_bkv'], params['at_Wo'], params['at_bo'],
        params['at_G'], const['at_GT'],
        params['ps_W1a'], params['ps_W2'], params['ps_b2'], params['ps_W3'],
        params['ps_b3'],
        const['rep_i'], const['rep_j'], const['rep_iT'], const['rep_jT'],
        const['dist_mask'], const['dist_maskT'],
    )
    in_specs = [_vmem()] * 7 + [_smem()] + [_vmem()] * (len(ins) - 8)
    return pl.pallas_call(
        _graph_step_kernel,
        out_shape=(
            jax.ShapeDtypeStruct((N, F), jnp.float32),   # new node features
            jax.ShapeDtypeStruct((N, N), jnp.float32),   # new edge_attr
            jax.ShapeDtypeStruct((1, F), jnp.float32),   # aggregated features
            jax.ShapeDtypeStruct((N, 1), jnp.float32),   # attention weights
            jax.ShapeDtypeStruct((1, 1), jnp.float32),   # path confidence
        ),
        in_specs=in_specs,
        out_specs=(_vmem(), _vmem(), _vmem(), _vmem(), _vmem()),
        compiler_params=pltpu.CompilerParams(vmem_limit_bytes=_VMEM_LIMIT),
    )(*ins)


# ---------------------------------------------------------------------------
# Parameters, derived constants and graph state.
# ---------------------------------------------------------------------------
def init_params(key):
    kit = iter(jax.random.split(key, 48))

    def W(shape, scale=None):
        s = scale if scale is not None else 1.0 / math.sqrt(shape[0])
        return jax.random.normal(next(kit), shape, jnp.float32) * s

    p = {}
    # graph_ode.feature_encoder / context_encoder / query_net
    p['fe_W1'] = W((V, H)); p['fe_b1'] = jnp.zeros((1, H), jnp.float32)
    p['fe_W2'] = W((H, F)); p['fe_b2'] = jnp.zeros((1, F), jnp.float32)
    p['ce_W'] = W((V, F)); p['ce_b'] = jnp.zeros((1, F), jnp.float32)
    p['qn_W1'] = W((V, H)); p['qn_b1'] = jnp.zeros((1, H), jnp.float32)
    p['qn_W2'] = W((H, F)); p['qn_b2'] = jnp.zeros((1, F), jnp.float32)
    # temporal_dynamics (Linear(2F,H) split into state/context halves)
    p['td_W1a'] = W((F, H)); p['td_W1b'] = W((F, H))
    p['td_b1'] = jnp.zeros((1, H), jnp.float32)
    p['td_W2'] = W((H, H)); p['td_b2'] = jnp.zeros((1, H), jnp.float32)
    p['td_W3'] = W((H, F)); p['td_b3'] = jnp.zeros((1, F), jnp.float32)
    # diffusion_net
    p['df_W1'] = W((F, H2)); p['df_b1'] = jnp.zeros((1, H2), jnp.float32)
    p['df_W2'] = W((H2, 1)); p['df_b2'] = jnp.zeros((1, 1), jnp.float32)
    # edge_predictor (Linear(2F+3,H) split into feat_i / feat_j / pos_diff parts)
    sc = 1.0 / math.sqrt(2 * F + 3)
    p['ep_W1a'] = W((F, H), scale=sc); p['ep_W1b'] = W((F, H), scale=sc)
    p['ep_W1c'] = W((3, H), scale=sc)
    p['ep_b1'] = jnp.zeros((1, H), jnp.float32)
    p['ep_W2'] = W((H, 64)); p['ep_b2'] = jnp.zeros((1, 64), jnp.float32)
    p['ep_W3'] = W((64, 1)); p['ep_b3'] = jnp.full((1, 1), 0.3, jnp.float32)
    # GraphLaplacian.edge_weight_net
    p['ew_W1'] = W((1, 32), scale=1.0); p['ew_b1'] = jnp.zeros((1, 32), jnp.float32)
    p['ew_W2'] = W((32, 1)); p['ew_b2'] = jnp.zeros((1, 1), jnp.float32)
    # graph_attention (nn.MultiheadAttention, 8 heads)
    p['at_Wq'] = W((F, F)); p['at_bq'] = jnp.zeros((1, F), jnp.float32)
    p['at_Wk'] = W((F, F)); p['at_bk'] = jnp.zeros((1, F), jnp.float32)
    p['at_Wv'] = W((F, F)); p['at_bv'] = jnp.zeros((1, F), jnp.float32)
    p['at_Wo'] = W((F, F)); p['at_bo'] = jnp.zeros((1, F), jnp.float32)
    head_id = jnp.arange(F) // HD
    p['at_G'] = jnp.zeros((F, NH), jnp.float32).at[jnp.arange(F), head_id].set(1.0)
    # goal_projection (Linear(1000, F), rows 1000..1023 zero-padded)
    gw = W((GOAL_IN, F), scale=1.0 / math.sqrt(GOAL_IN))
    p['gp_W'] = jnp.zeros((GP, F), jnp.float32).at[:GOAL_IN].set(gw)
    p['gp_b'] = jnp.zeros((1, F), jnp.float32)
    # path_scorer (biases 0.1 per the module's init_weights)
    p['ps_W1a'] = W((F, H)); p['ps_W1b'] = W((F, H))
    p['ps_b1'] = jnp.full((1, H), 0.1, jnp.float32)
    p['ps_W2'] = W((H, 64)); p['ps_b2'] = jnp.full((1, 64), 0.1, jnp.float32)
    p['ps_W3'] = W((64, 1)); p['ps_b3'] = jnp.full((1, 1), 0.1, jnp.float32)
    return p


def prepare_constants(params, node_positions):
    """Derived weights / selection matrices, computed once on the host."""
    c = {}
    # weights sharing the same LHS, concatenated so matmuls are wider in N
    c['enc_W1'] = jnp.concatenate([params['fe_W1'], params['ce_W'], params['qn_W1']], axis=1)
    c['enc_b1'] = jnp.concatenate([params['fe_b1'], params['ce_b'], params['qn_b1']], axis=1)
    c['ode_Wh'] = jnp.concatenate([params['td_W1a'], params['df_W1']], axis=1)
    c['at_Wkv'] = jnp.concatenate([params['at_Wk'], params['at_Wv']], axis=1)
    c['at_bkv'] = jnp.concatenate([params['at_bk'], params['at_bv']], axis=1)
    c['at_GT'] = params['at_G'].T
    # node-pair expansion selectors: replace per-row unrolls with one M=N*N matmul
    rep_i = np.kron(np.eye(N, dtype=np.float32), np.ones((N, 1), np.float32))   # (NN, N)
    rep_j = np.kron(np.ones((N, 1), np.float32), np.eye(N, dtype=np.float32))   # (NN, N)
    c['rep_i'] = jnp.asarray(rep_i); c['rep_j'] = jnp.asarray(rep_j)
    c['rep_iT'] = jnp.asarray(rep_i.T); c['rep_jT'] = jnp.asarray(rep_j.T)
    # edge_weight_net (scalar MLP) expressed as matmuls on the NxN attr matrix
    c['ew_R'] = jnp.asarray(np.kron(np.eye(N, dtype=np.float32),
                                    np.ones((1, 32), np.float32)))               # (N, 32N)
    c['ew_W1t'] = jnp.tile(params['ew_W1'], (1, N))                              # (1, 32N)
    c['ew_b1t'] = jnp.tile(params['ew_b1'], (1, N))
    c['ew_W2bd'] = jnp.kron(jnp.eye(N, dtype=jnp.float32), params['ew_W2'])      # (32N, N)
    # static geometry: node positions are fixed in this fixed-capacity graph
    c['ep_Cpos'] = node_positions @ params['ep_W1c']                              # (N, H)
    pd = node_positions[None, :, :] - node_positions[:, None, :]
    dist = jnp.sqrt(jnp.sum(pd * pd, axis=-1))
    upper = jnp.triu(jnp.ones((N, N), dtype=bool), k=1)
    dm = (upper & (dist < MAX_EDGE_DIST)).astype(jnp.float32)
    c['dist_mask'] = dm
    c['dist_maskT'] = dm.T
    return c


def init_graph_state(key, params, const_positions=None):
    kf, kp = jax.random.split(key)
    node_features = jax.random.normal(kf, (N, F), jnp.float32) * 0.1
    node_positions = (const_positions if const_positions is not None
                      else jax.random.uniform(kp, (N, 3), jnp.float32, 0.0, 2.0))
    return node_features, node_positions


# ---------------------------------------------------------------------------
# Jitted forward core (per forward call: 1 prologue + B graph-step kernels).
# ---------------------------------------------------------------------------
@jax.jit
def _forward_core(params, const, nodes, eattr, node_pos, observation, position,
                  goal_features, dt_arr):
    goal_pad = jnp.pad(goal_features, ((0, 0), (0, GP - GOAL_IN)))
    obs_f, ctx_td, q_proj, pg_ps = run_prologue(observation, goal_pad, params, const)

    feats, confs = [], []
    attn0 = None
    for b in range(B):
        d2 = jnp.sum((node_pos - position[b][None, :]) ** 2, axis=1)
        onehot = jax.nn.one_hot(jnp.argmin(d2), N, dtype=jnp.float32).reshape(N, 1)
        dt_b = dt_arr[b].reshape(1, 1)
        nodes, eattr, agg, attn, conf = run_graph_step(
            nodes, eattr, ctx_td[b:b + 1], obs_f[b:b + 1], q_proj[b:b + 1],
            pg_ps[b:b + 1], onehot, dt_b, params, const)
        feats.append(agg[0])
        confs.append(conf[0, 0])
        if attn0 is None:
            attn0 = attn[:, 0]
    num_edges = jnp.sum((eattr > 0.0).astype(jnp.int32)) // 2
    return (jnp.stack(feats), jnp.stack(confs), attn0, nodes, eattr, num_edges)


def unified_forward(params, const, gs, observation, position, goal_features=None,
                    time_delta=1.0):
    current_time = gs['last_update_time'] + time_delta
    # Only the first batch item integrates the ODE (current_time > last_update_time
    # becomes false once last_update_time is bumped, exactly as in the module).
    dts = np.zeros((B,), np.float32)
    if current_time > gs['last_update_time']:
        dts[0] = (current_time - gs['last_update_time']) / RK_STEPS

    has_goal = goal_features is not None
    if not has_goal:
        goal_features = jnp.zeros((observation.shape[0], GOAL_IN), jnp.float32)

    mem, confs, attn0, nodes, eattr, num_edges = _forward_core(
        params, const, gs['node_features'], gs['edge_attr'], gs['node_positions'],
        observation, position, goal_features, jnp.asarray(dts))

    if not has_goal:
        confs = jnp.zeros_like(confs)

    new_gs = dict(gs, node_features=nodes, edge_attr=eattr,
                  last_update_time=current_time)
    info = {
        'num_nodes': new_gs['num_nodes'],
        'num_edges': num_edges,                 # device scalar (no host sync)
        'attention_weights': attn0,
        'path_confidence': confs,
        'graph_state': new_gs,
    }
    return mem, info


# ---------------------------------------------------------------------------
if __name__ == "__main__":
    params = init_params(jax.random.PRNGKey(42))

    node_features, node_positions = init_graph_state(jax.random.PRNGKey(7), params)
    const = prepare_constants(params, node_positions)
    gs = {
        'node_features': node_features,
        'node_positions': node_positions,
        'edge_attr': run_edge_init(node_features, params, const),
        'num_nodes': N,
        'last_update_time': 0.0,
    }

    key = jax.random.PRNGKey(0)
    k_obs, k_pos, k_goal = jax.random.split(key, 3)
    observation = jax.random.normal(k_obs, (B, V), jnp.float32)
    position = jax.random.uniform(k_pos, (B, 3), jnp.float32, 0.0, 2.0)
    goal_features = jax.random.normal(k_goal, (B, GOAL_IN), jnp.float32)

    memory_features, info = unified_forward(
        params, const, gs, observation, position, goal_features, time_delta=1.0)

    jax.block_until_ready(memory_features)
    jax.block_until_ready(info['path_confidence'])
    jax.block_until_ready(info['num_edges'])
    assert memory_features.shape == (B, F)
    assert info['attention_weights'].shape == (N,)
    print("KERNEL_OK")
</pallas_src>

<mosaic_0001>
module attributes {stable_mosaic.version = 11 : i64} {
  func.func @_edge_init_kernel(%arg0: memref<8x128xf32, #tpu.memory_space<vmem>>, %arg1: memref<8x128xf32, #tpu.memory_space<vmem>>, %arg2: memref<128x128xf32, #tpu.memory_space<vmem>>, %arg3: memref<128x128xf32, #tpu.memory_space<vmem>>, %arg4: memref<1x128xf32, #tpu.memory_space<vmem>>, %arg5: memref<128x64xf32, #tpu.memory_space<vmem>>, %arg6: memref<1x64xf32, #tpu.memory_space<vmem>>, %arg7: memref<64x1xf32, #tpu.memory_space<vmem>>, %arg8: memref<1x1xf32, #tpu.memory_space<vmem>>, %arg9: memref<64x8xf32, #tpu.memory_space<vmem>>, %arg10: memref<64x8xf32, #tpu.memory_space<vmem>>, %arg11: memref<8x64xf32, #tpu.memory_space<vmem>>, %arg12: memref<8x64xf32, #tpu.memory_space<vmem>>, %arg13: memref<8x8xf32, #tpu.memory_space<vmem>>, %arg14: memref<8x8xf32, #tpu.memory_space<vmem>>, %arg15: memref<8x8xf32, #tpu.memory_space<vmem>>) attributes {dimension_semantics = [], scalar_prefetch = 0 : i64, scratch_operands = 0 : i64, tpu.core_type = #tpu.core_type<tc>} {
    %c0 = arith.constant 0 : index
    %c0_0 = arith.constant 0 : index
    %0 = vector.load %arg0[%c0, %c0_0] : memref<8x128xf32, #tpu.memory_space<vmem>>, vector<8x128xf32>
    %c0_1 = arith.constant 0 : index
    %c0_2 = arith.constant 0 : index
    %1 = vector.load %arg1[%c0_1, %c0_2] : memref<8x128xf32, #tpu.memory_space<vmem>>, vector<8x128xf32>
    %c0_3 = arith.constant 0 : index
    %c0_4 = arith.constant 0 : index
    %2 = vector.load %arg2[%c0_3, %c0_4] : memref<128x128xf32, #tpu.memory_space<vmem>>, vector<128x128xf32>
    %c0_5 = arith.constant 0 : index
    %c0_6 = arith.constant 0 : index
    %3 = vector.load %arg3[%c0_5, %c0_6] : memref<128x128xf32, #tpu.memory_space<vmem>>, vector<128x128xf32>
    %c0_7 = arith.constant 0 : index
    %c0_8 = arith.constant 0 : index
    %4 = vector.load %arg4[%c0_7, %c0_8] : memref<1x128xf32, #tpu.memory_space<vmem>>, vector<1x128xf32>
    %c0_9 = arith.constant 0 : index
    %c0_10 = arith.constant 0 : index
    %5 = vector.load %arg5[%c0_9, %c0_10] : memref<128x64xf32, #tpu.memory_space<vmem>>, vector<128x64xf32>
    %c0_11 = arith.constant 0 : index
    %c0_12 = arith.constant 0 : index
    %6 = vector.load %arg6[%c0_11, %c0_12] : memref<1x64xf32, #tpu.memory_space<vmem>>, vector<1x64xf32>
    %c0_13 = arith.constant 0 : index
    %c0_14 = arith.constant 0 : index
    %7 = vector.load %arg7[%c0_13, %c0_14] : memref<64x1xf32, #tpu.memory_space<vmem>>, vector<64x1xf32>
    %c0_15 = arith.constant 0 : index
    %c0_16 = arith.constant 0 : index
    %8 = vector.load %arg8[%c0_15, %c0_16] : memref<1x1xf32, #tpu.memory_space<vmem>>, vector<1x1xf32>
    %c0_17 = arith.constant 0 : index
    %c0_18 = arith.constant 0 : index
    %9 = vector.load %arg9[%c0_17, %c0_18] : memref<64x8xf32, #tpu.memory_space<vmem>>, vector<64x8xf32>
    %c0_19 = arith.constant 0 : index
    %c0_20 = arith.constant 0 : index
    %10 = vector.load %arg10[%c0_19, %c0_20] : memref<64x8xf32, #tpu.memory_space<vmem>>, vector<64x8xf32>
    %c0_21 = arith.constant 0 : index
    %c0_22 = arith.constant 0 : index
    %11 = vector.load %arg11[%c0_21, %c0_22] : memref<8x64xf32, #tpu.memory_space<vmem>>, vector<8x64xf32>
    %c0_23 = arith.constant 0 : index
    %c0_24 = arith.constant 0 : index
    %12 = vector.load %arg12[%c0_23, %c0_24] : memref<8x64xf32, #tpu.memory_space<vmem>>, vector<8x64xf32>
    %c0_25 = arith.constant 0 : index
    %c0_26 = arith.constant 0 : index
    %13 = vector.load %arg13[%c0_25, %c0_26] : memref<8x8xf32, #tpu.memory_space<vmem>>, vector<8x8xf32>
    %c0_27 = arith.constant 0 : index
    %c0_28 = arith.constant 0 : index
    %14 = vector.load %arg14[%c0_27, %c0_28] : memref<8x8xf32, #tpu.memory_space<vmem>>, vector<8x8xf32>
    %cst = arith.constant dense<0.000000e+00> : vector<8x128xf32>
    %15 = tpu.matmul %0, %2, %cst {dimension_numbers = #tpu.dot_dimension_numbers<[1], [0], [0], [1], [0, 0, 1, 1], [], []>} : vector<8x128xf32>, vector<128x128xf32>, vector<8x128xf32> -> vector<8x128xf32>
    %cst_29 = arith.constant dense<0.000000e+00> : vector<8x128xf32>
    %16 = tpu.matmul %0, %3, %cst_29 {dimension_numbers = #tpu.dot_dimension_numbers<[1], [0], [0], [1], [0, 0, 1, 1], [], []>} : vector<8x128xf32>, vector<128x128xf32>, vector<8x128xf32> -> vector<8x128xf32>
    %17 = arith.subf %15, %1 : vector<8x128xf32>
    %cst_30 = arith.constant dense<0.000000e+00> : vector<64x128xf32>
    %18 = tpu.matmul %9, %17, %cst_30 {dimension_numbers = #tpu.dot_dimension_numbers<[1], [0], [0], [1], [0, 0, 1, 1], [], []>} : vector<64x8xf32>, vector<8x128xf32>, vector<64x128xf32> -> vector<64x128xf32>
    %19 = arith.addf %16, %1 : vector<8x128xf32>
    %cst_31 = arith.constant dense<0.000000e+00> : vector<64x128xf32>
    %20 = tpu.matmul %10, %19, %cst_31 {dimension_numbers = #tpu.dot_dimension_numbers<[1], [0], [0], [1], [0, 0, 1, 1], [], []>} : vector<64x8xf32>, vector<8x128xf32>, vector<64x128xf32> -> vector<64x128xf32>
    %21 = arith.addf %18, %20 : vector<64x128xf32>
    %22 = vector.broadcast %4 : vector<1x128xf32> to vector<64x128xf32>
    %23 = arith.addf %21, %22 : vector<64x128xf32>
    %cst_32 = arith.constant 0.000000e+00 : f32
    %24 = vector.broadcast %cst_32 : f32 to vector<64x128xf32>
    %25 = arith.maximumf %23, %24 : vector<64x128xf32>
    %cst_33 = arith.constant dense<0.000000e+00> : vector<64x64xf32>
    %26 = tpu.matmul %25, %5, %cst_33 {dimension_numbers = #tpu.dot_dimension_numbers<[1], [0], [0], [1], [0, 0, 1, 1], [], []>} : vector<64x128xf32>, vector<128x64xf32>, vector<64x64xf32> -> vector<64x64xf32>
    %27 = vector.broadcast %6 : vector<1x64xf32> to vector<64x64xf32>
    %28 = arith.addf %26, %27 : vector<64x64xf32>
    %cst_34 = arith.constant 0.000000e+00 : f32
    %29 = vector.broadcast %cst_34 : f32 to vector<64x64xf32>
    %30 = arith.maximumf %28, %29 : vector<64x64xf32>
    %cst_35 = arith.constant dense<0.000000e+00> : vector<64x1xf32>
    %31 = tpu.matmul %30, %7, %cst_35 {dimension_numbers = #tpu.dot_dimension_numbers<[1], [0], [0], [1], [0, 0, 1, 1], [], []>} : vector<64x64xf32>, vector<64x1xf32>, vector<64x1xf32> -> vector<64x1xf32>
    %32 = vector.broadcast %8 : vector<1x1xf32> to vector<64x1xf32>
    %33 = arith.addf %31, %32 : vector<64x1xf32>
    %34 = arith.negf %33 : vector<64x1xf32>
    %35 = math.exp %34 : vector<64x1xf32>
    %cst_36 = arith.constant 1.000000e+00 : f32
    %36 = vector.broadcast %cst_36 : f32 to vector<64x1xf32>
    %37 = arith.addf %36, %35 : vector<64x1xf32>
    %38 = arith.divf %36, %37 : vector<64x1xf32>
    %39 = vector.broadcast %38 : vector<64x1xf32> to vector<64x8xf32>
    %40 = arith.mulf %39, %10 : vector<64x8xf32>
    %cst_37 = arith.constant dense<0.000000e+00> : vector<8x8xf32>
    %41 = tpu.matmul %11, %40, %cst_37 {dimension_numbers = #tpu.dot_dimension_numbers<[1], [0], [0], [1], [0, 0, 1, 1], [], []>} : vector<8x64xf32>, vector<64x8xf32>, vector<8x8xf32> -> vector<8x8xf32>
    %42 = vector.broadcast %38 : vector<64x1xf32> to vector<64x8xf32>
    %43 = arith.mulf %42, %9 : vector<64x8xf32>
    %cst_38 = arith.constant dense<0.000000e+00> : vector<8x8xf32>
    %44 = tpu.matmul %12, %43, %cst_38 {dimension_numbers = #tpu.dot_dimension_numbers<[1], [0], [0], [1], [0, 0, 1, 1], [], []>} : vector<8x64xf32>, vector<64x8xf32>, vector<8x8xf32> -> vector<8x8xf32>
    %cst_39 = arith.constant 5.000000e-01 : f32
    %45 = vector.broadcast %cst_39 : f32 to vector<8x8xf32>
    %46 = arith.cmpf ogt, %41, %45 : vector<8x8xf32>
    %47 = arith.extui %46 : vector<8x8xi1> to vector<8x8xi32>
    %48 = arith.sitofp %47 : vector<8x8xi32> to vector<8x8xf32>
    %49 = arith.mulf %13, %48 : vector<8x8xf32>
    %cst_40 = arith.constant 5.000000e-01 : f32
    %50 = vector.broadcast %cst_40 : f32 to vector<8x8xf32>
    %51 = arith.cmpf ogt, %44, %50 : vector<8x8xf32>
    %52 = arith.extui %51 : vector<8x8xi1> to vector<8x8xi32>
    %53 = arith.sitofp %52 : vector<8x8xi32> to vector<8x8xf32>
    %54 = arith.mulf %14, %53 : vector<8x8xf32>
    %55 = arith.mulf %49, %41 : vector<8x8xf32>
    %56 = arith.mulf %54, %44 : vector<8x8xf32>
    %57 = arith.addf %55, %56 : vector<8x8xf32>
    %c0_41 = arith.constant 0 : index
    %c0_42 = arith.constant 0 : index
    %58 = vector.load %arg15[%c0_41, %c0_42] : memref<8x8xf32, #tpu.memory_space<vmem>>, vector<8x8xf32>
    tpu.vector_store %arg15[%c0_41, %c0_42], %57 {strides = array<i32>} : memref<8x8xf32, #tpu.memory_space<vmem>>, vector<8x8xf32>,
    return
  }
}

</mosaic_0001>

<llo_original>
// kernel: tpu_custom_call.1
$region0: #{tpu_custom_call.1}
  #allocation0 [shape = 'u32[]', space=smem, size = 0x4, offset = 0x4, fixed_abs, tag = 'smem constant byte address 0x4 - core index']
  #allocation1 [shape = 'u32[144,128]{1,0:T(1,128)}', space=vmem, size = 0x12000, scoped, tag = 'internal scratch']
  #allocation2 [shape = 'f32[1,1]{1,0:T(1,128)S(1)}', space=vmem, size = 0x200, scoped, tag = 'scoped memory for tpu_custom_call.1']
  %s0 = inlined_call_operand.vmem [shape: f32[8,128], index: 0, kind: input, shape index: {}]
  %s1 = inlined_call_operand.vmem [shape: f32[8,128], index: 1, kind: input, shape index: {}]
  %s2 = inlined_call_operand.vmem [shape: f32[128,128], index: 2, kind: input, shape index: {}]
  %s3 = inlined_call_operand.vmem [shape: f32[128,128], index: 3, kind: input, shape index: {}]
  %s4 = inlined_call_operand.vmem [shape: f32[1,128], index: 4, kind: input, shape index: {}]
  %s5 = inlined_call_operand.vmem [shape: f32[128,64], index: 5, kind: input, shape index: {}]
  %s6 = inlined_call_operand.vmem [shape: f32[1,64], index: 6, kind: input, shape index: {}]
  %s7 = inlined_call_operand.vmem [shape: f32[64,1], index: 7, kind: input, shape index: {}]
  %s8 = inlined_call_operand.<no memory space> [shape: f32[1,1], index: 8, kind: input, shape index: {}]
  %s9 = inlined_call_operand.vmem [shape: f32[64,8], index: 9, kind: input, shape index: {}]
  %s10 = inlined_call_operand.vmem [shape: f32[64,8], index: 10, kind: input, shape index: {}]
  %s11 = inlined_call_operand.vmem [shape: f32[8,64], index: 11, kind: input, shape index: {}]
  %s12 = inlined_call_operand.vmem [shape: f32[8,64], index: 12, kind: input, shape index: {}]
  %s13 = inlined_call_operand.vmem [shape: f32[8,8], index: 13, kind: input, shape index: {}]
  %s14 = inlined_call_operand.vmem [shape: f32[8,8], index: 14, kind: input, shape index: {}]
  %s15 = inlined_call_operand.hbm [shape: f32[8,8], index: 15, kind: output, shape index: {}]
  %s16 = sld [smem:[#allocation0]]
  $region70: #{tpu_custom_call.1} parent=0
    _
  %s18 = ssub.s32 1, %s16
  %s19 = scalar_select 0, %s18, %s16
  %v20 = vstv %s8
  %21 = vst [vmem:[#allocation2] sm:$0x1] %v20
  $region1: #{tpu_custom_call.1} parent=0
    #allocation3 [shape = 'u8[4096]{0}', space=vmem, size = 0x1000, scoped, tag = 'output window, operand 0, single buffered']
    #allocation4 [shape = 's32[1]{0}', space=sflag, size = 0x4, scoped, tag = 'scoped memory for tpu_custom_call.1']
    %22 = vsyncpa [#allocation4], 0
    // Predicated region
    $region2: #{tpu_custom_call.1} parent=1 // pred_check
      _
    $region3: #{tpu_custom_call.1} parent=1 // pred_check_branch
      %24 = sbr.rel (0) target = $region5
    $region4: #{tpu_custom_call.1} parent=1 // pred_region
      _
    $region5: #{tpu_custom_call.1} parent=1 // pred_fallthru
      _
    // Predicated region
    $region6: #{tpu_custom_call.1} parent=1 // pred_check
      _
    $region7: #{tpu_custom_call.1} parent=1 // pred_check_branch
      %26 = sbr.rel (0) target = $region9
    $region8: #{tpu_custom_call.1} parent=1 // pred_region
      _
    $region9: #{tpu_custom_call.1} parent=1 // pred_fallthru
      _
    // Predicated region
    $region10: #{tpu_custom_call.1} parent=1 // pred_check
      _
    $region11: #{tpu_custom_call.1} parent=1 // pred_check_branch
      %28 = sbr.rel (0) target = $region13
    $region12: #{tpu_custom_call.1} parent=1 // pred_region
      _
    $region13: #{tpu_custom_call.1} parent=1 // pred_fallthru
      _
    // Predicated region
    $region14: #{tpu_custom_call.1} parent=1 // pred_check
      _
    $region15: #{tpu_custom_call.1} parent=1 // pred_check_branch
      %30 = sbr.rel (0) target = $region17
    $region16: #{tpu_custom_call.1} parent=1 // pred_region
      _
    $region17: #{tpu_custom_call.1} parent=1 // pred_fallthru
      _
    // Predicated region
    $region18: #{tpu_custom_call.1} parent=1 // pred_check
      _
    $region19: #{tpu_custom_call.1} parent=1 // pred_check_branch
      %32 = sbr.rel (0) target = $region21
    $region20: #{tpu_custom_call.1} parent=1 // pred_region
      _
    $region21: #{tpu_custom_call.1} parent=1 // pred_fallthru
      _
    // Predicated region
    $region22: #{tpu_custom_call.1} parent=1 // pred_check
      _
    $region23: #{tpu_custom_call.1} parent=1 // pred_check_branch
      %34 = sbr.rel (0) target = $region25
    $region24: #{tpu_custom_call.1} parent=1 // pred_region
      _
    $region25: #{tpu_custom_call.1} parent=1 // pred_fallthru
      _
    // Predicated region
    $region26: #{tpu_custom_call.1} parent=1 // pred_check
      _
    $region27: #{tpu_custom_call.1} parent=1 // pred_check_branch
      %36 = sbr.rel (0) target = $region29
    $region28: #{tpu_custom_call.1} parent=1 // pred_region
      _
    $region29: #{tpu_custom_call.1} parent=1 // pred_fallthru
      _
    // Predicated region
    $region30: #{tpu_custom_call.1} parent=1 // pred_check
      _
    $region31: #{tpu_custom_call.1} parent=1 // pred_check_branch
      %38 = sbr.rel (0) target = $region33
    $region32: #{tpu_custom_call.1} parent=1 // pred_region
      _
    $region33: #{tpu_custom_call.1} parent=1 // pred_fallthru
      _
    // Predicated region
    $region34: #{tpu_custom_call.1} parent=1 // pred_check
      _
    $region35: #{tpu_custom_call.1} parent=1 // pred_check_branch
      %40 = sbr.rel (0) target = $region37
    $region36: #{tpu_custom_call.1} parent=1 // pred_region
      _
    $region37: #{tpu_custom_call.1} parent=1 // pred_fallthru
      _
    // Predicated region
    $region38: #{tpu_custom_call.1} parent=1 // pred_check
      _
    $region39: #{tpu_custom_call.1} parent=1 // pred_check_branch
      %42 = sbr.rel (0) target = $region41
    $region40: #{tpu_custom_call.1} parent=1 // pred_region
      _
    $region41: #{tpu_custom_call.1} parent=1 // pred_fallthru
      _
    // Predicated region
    $region42: #{tpu_custom_call.1} parent=1 // pred_check
      _
    $region43: #{tpu_custom_call.1} parent=1 // pred_check_branch
      %44 = sbr.rel (0) target = $region45
    $region44: #{tpu_custom_call.1} parent=1 // pred_region
      _
    $region45: #{tpu_custom_call.1} parent=1 // pred_fallthru
      _
    // Predicated region
    $region46: #{tpu_custom_call.1} parent=1 // pred_check
      _
    $region47: #{tpu_custom_call.1} parent=1 // pred_check_branch
      %46 = sbr.rel (0) target = $region49
    $region48: #{tpu_custom_call.1} parent=1 // pred_region
      _
    $region49: #{tpu_custom_call.1} parent=1 // pred_fallthru
      _
    // Predicated region
    $region50: #{tpu_custom_call.1} parent=1 // pred_check
      _
    $region51: #{tpu_custom_call.1} parent=1 // pred_check_branch
      %48 = sbr.rel (0) target = $region53
    $region52: #{tpu_custom_call.1} parent=1 // pred_region
      _
    $region53: #{tpu_custom_call.1} parent=1 // pred_fallthru
      _
    // Predicated region
    $region54: #{tpu_custom_call.1} parent=1 // pred_check
      _
    $region55: #{tpu_custom_call.1} parent=1 // pred_check_branch
      %50 = sbr.rel (0) target = $region57
    $region56: #{tpu_custom_call.1} parent=1 // pred_region
      _
    $region57: #{tpu_custom_call.1} parent=1 // pred_fallthru
      _
    // Predicated region
    $region58: #{tpu_custom_call.1} parent=1 // pred_check
      _
    $region59: #{tpu_custom_call.1} parent=1 // pred_check_branch
      %52 = sbr.rel (0) target = $region61
    $region60: #{tpu_custom_call.1} parent=1 // pred_region
      _
    $region61: #{tpu_custom_call.1} parent=1 // pred_fallthru
      _
    %v53 = vld [vmem:[%s0] sm:$0xff]
    %v54 = vld [vmem:[%s1] sm:$0xff]
    %v55 = vld [vmem:[%s2] sm:$0xff]
    %v56 = vld [vmem:[%s2 + $0x8] sm:$0xff]
    %v57 = vld [vmem:[%s2 + $0x10] sm:$0xff]
    %v58 = vld [vmem:[%s2 + $0x18] sm:$0xff]
    %v59 = vld [vmem:[%s2 + $0x20] sm:$0xff]
    %v60 = vld [vmem:[%s2 + $0x28] sm:$0xff]
    %v61 = vld [vmem:[%s2 + $0x30] sm:$0xff]
    %v62 = vld [vmem:[%s2 + $0x38] sm:$0xff]
    %v63 = vld [vmem:[%s2 + $0x40] sm:$0xff]
    %v64 = vld [vmem:[%s2 + $0x48] sm:$0xff]
    %v65 = vld [vmem:[%s2 + $0x50] sm:$0xff]
    %v66 = vld [vmem:[%s2 + $0x58] sm:$0xff]
    %v67 = vld [vmem:[%s2 + $0x60] sm:$0xff]
    %v68 = vld [vmem:[%s2 + $0x68] sm:$0xff]
    %v69 = vld [vmem:[%s2 + $0x70] sm:$0xff]
    %v70 = vld [vmem:[%s2 + $0x78] sm:$0xff]
    %v71 = vld [vmem:[%s3] sm:$0xff]
    %v72 = vld [vmem:[%s3 + $0x8] sm:$0xff]
    %v73 = vld [vmem:[%s3 + $0x10] sm:$0xff]
    %v74 = vld [vmem:[%s3 + $0x18] sm:$0xff]
    %v75 = vld [vmem:[%s3 + $0x20] sm:$0xff]
    %v76 = vld [vmem:[%s3 + $0x28] sm:$0xff]
    %v77 = vld [vmem:[%s3 + $0x30] sm:$0xff]
    %v78 = vld [vmem:[%s3 + $0x38] sm:$0xff]
    %v79 = vld [vmem:[%s3 + $0x40] sm:$0xff]
    %v80 = vld [vmem:[%s3 + $0x48] sm:$0xff]
    %v81 = vld [vmem:[%s3 + $0x50] sm:$0xff]
    %v82 = vld [vmem:[%s3 + $0x58] sm:$0xff]
    %v83 = vld [vmem:[%s3 + $0x60] sm:$0xff]
    %v84 = vld [vmem:[%s3 + $0x68] sm:$0xff]
    %v85 = vld [vmem:[%s3 + $0x70] sm:$0xff]
    %v86 = vld [vmem:[%s3 + $0x78] sm:$0xff]
    %v87 = vld [vmem:[%s4] sm:$0x1]
    %v88 = vld [vmem:[%s5] sm:$0xff]
    %v89 = vld [vmem:[%s5 + $0x8] sm:$0xff]
    %v90 = vld [vmem:[%s5 + $0x10] sm:$0xff]
    %v91 = vld [vmem:[%s5 + $0x18] sm:$0xff]
    %v92 = vld [vmem:[%s5 + $0x20] sm:$0xff]
    %v93 = vld [vmem:[%s5 + $0x28] sm:$0xff]
    %v94 = vld [vmem:[%s5 + $0x30] sm:$0xff]
    %v95 = vld [vmem:[%s5 + $0x38] sm:$0xff]
    %v96 = vld [vmem:[%s5 + $0x40] sm:$0xff]
    %v97 = vld [vmem:[%s5 + $0x48] sm:$0xff]
    %v98 = vld [vmem:[%s5 + $0x50] sm:$0xff]
    %v99 = vld [vmem:[%s5 + $0x58] sm:$0xff]
    %v100 = vld [vmem:[%s5 + $0x60] sm:$0xff]
    %v101 = vld [vmem:[%s5 + $0x68] sm:$0xff]
    %v102 = vld [vmem:[%s5 + $0x70] sm:$0xff]
    %v103 = vld [vmem:[%s5 + $0x78] sm:$0xff]
    %v104 = vld [vmem:[%s6] sm:$0x1]
    %v105 = vld [vmem:[%s7] sm:$0xff]
    %v106 = vld [vmem:[%s7 + $0x8] sm:$0xff]
    %v107 = vld [vmem:[%s7 + $0x10] sm:$0xff]
    %v108 = vld [vmem:[%s7 + $0x18] sm:$0xff]
    %v109 = vld [vmem:[%s7 + $0x20] sm:$0xff]
    %v110 = vld [vmem:[%s7 + $0x28] sm:$0xff]
    %v111 = vld [vmem:[%s7 + $0x30] sm:$0xff]
    %v112 = vld [vmem:[%s7 + $0x38] sm:$0xff]
    %v113 = vld [vmem:[#allocation2] sm:$0x1]
    %v114 = vld [vmem:[%s9] sm:$0xff]
    %v115 = vld [vmem:[%s9 + $0x8] sm:$0xff]
    %v116 = vld [vmem:[%s9 + $0x10] sm:$0xff]
    %v117 = vld [vmem:[%s9 + $0x18] sm:$0xff]
    %v118 = vld [vmem:[%s9 + $0x20] sm:$0xff]
    %v119 = vld [vmem:[%s9 + $0x28] sm:$0xff]
    %v120 = vld [vmem:[%s9 + $0x30] sm:$0xff]
    %v121 = vld [vmem:[%s9 + $0x38] sm:$0xff]
    %v122 = vld [vmem:[%s10] sm:$0xff]
    %v123 = vld [vmem:[%s10 + $0x8] sm:$0xff]
    %v124 = vld [vmem:[%s10 + $0x10] sm:$0xff]
    %v125 = vld [vmem:[%s10 + $0x18] sm:$0xff]
    %v126 = vld [vmem:[%s10 + $0x20] sm:$0xff]
    %v127 = vld [vmem:[%s10 + $0x28] sm:$0xff]
    %v128 = vld [vmem:[%s10 + $0x30] sm:$0xff]
    %v129 = vld [vmem:[%s10 + $0x38] sm:$0xff]
    %v130 = vld [vmem:[%s11] sm:$0xff]
    %v131 = vld [vmem:[%s12] sm:$0xff]
    %v132 = vld [vmem:[%s13] sm:$0xff]
    %v133 = vld [vmem:[%s14] sm:$0xff]
    %134 = vmatprep.subr.mxu0 0.0
    %135 = vmatpush1.msra.mxu0 %v55
    %136 = vmatprep.subr.mxu0 0.0
    %137 = vmatpush1.msra.mxu0 %v56
    %138 = vmatprep.subr.mxu0 0.0
    %139 = vmatpush1.msra.mxu0 %v57
    %140 = vmatprep.subr.mxu0 0.0
    %141 = vmatpush1.msra.mxu0 %v58
    %142 = vmatprep.subr.mxu0 0.0
    %143 = vmatpush1.msra.mxu0 %v59
    %144 = vmatprep.subr.mxu0 0.0
    %145 = vmatpush1.msra.mxu0 %v60
    %146 = vmatprep.subr.mxu0 0.0
    %147 = vmatpush1.msra.mxu0 %v61
    %148 = vmatprep.subr.mxu0 0.0
    %149 = vmatpush1.msra.mxu0 %v62
    %150 = vmatprep.subr.mxu0 0.0
    %151 = vmatpush1.msra.mxu0 %v63
    %152 = vmatprep.subr.mxu0 0.0
    %153 = vmatpush1.msra.mxu0 %v64
    %154 = vmatprep.subr.mxu0 0.0
    %155 = vmatpush1.msra.mxu0 %v65
    %156 = vmatprep.subr.mxu0 0.0
    %157 = vmatpush1.msra.mxu0 %v66
    %158 = vmatprep.subr.mxu0 0.0
    %159 = vmatpush1.msra.mxu0 %v67
    %160 = vmatprep.subr.mxu0 0.0
    %161 = vmatpush1.msra.mxu0 %v68
    %162 = vmatprep.subr.mxu0 0.0
    %163 = vmatpush1.msra.mxu0 %v69
    %164 = vmatprep.subr.mxu0 0.0
    %165 = vmatpush1.msra.mxu0 %v70
    %166 = vmatprep.subr.mxu0 0.0
    %167 = vmatpush1.msra.mxu0 0.0
    %168 = vmatprep.subr.mxu0 0.0
    %169 = vmatpush1.msra.mxu0 0.0
    %170 = vmatprep.subr.mxu0 0.0
    %171 = vmatpush1.msra.mxu0 0.0
    %172 = vmatprep.subr.mxu0 0.0
    %173 = vmatpush1.msra.mxu0 0.0
    %174 = vmatprep.subr.mxu0 0.0
    %175 = vmatpush1.msra.mxu0 0.0
    %176 = vmatprep.subr.mxu0 0.0
    %177 = vmatpush1.msra.mxu0 0.0
    %178 = vmatprep.subr.mxu0 0.0
    %179 = vmatpush1.msra.mxu0 0.0
    %180 = vmatprep.subr.mxu0 0.0
    %181 = vmatpush1.msra.mxu0 0.0
    %182 = vmatprep.subr.mxu0 0.0
    %183 = vmatpush1.msra.mxu0 0.0
    %184 = vmatprep.subr.mxu0 0.0
    %185 = vmatpush1.msra.mxu0 0.0
    %186 = vmatprep.subr.mxu0 0.0
    %187 = vmatpush1.msra.mxu0 0.0
    %188 = vmatprep.subr.mxu0 0.0
    %189 = vmatpush1.msra.mxu0 0.0
    %190 = vmatprep.subr.mxu0 0.0
    %191 = vmatpush1.msra.mxu0 0.0
    %192 = vmatprep.subr.mxu0 0.0
    %193 = vmatpush1.msra.mxu0 0.0
    %194 = vmatprep.subr.mxu0 0.0
    %195 = vmatpush1.msra.mxu0 0.0
    %196 = vmatprep.subr.mxu0 0.0
    %197 = vmatpush1.msra.mxu0 0.0
    %198 = vmatprep.mubr.f32.mxu0 0.0
    %199 = vmatmul.mubr.f32.gmra.mrb[0].mxu0 %v53
    %v200 = vpop.f32.mrb[0].mxu0
    %v201 = vadd.f32 0.0, %v200
    %v202 = vpop.f32.mrb[0].mxu0
    %203 = vdwg.mxu0
    %v204 = vsub.f32 %v201, %v54
    %205 = vmatprep.subr.mxu0 0.0
    %206 = vmatpush1.msra.mxu0 %v71
    %207 = vmatprep.subr.mxu0 0.0
    %208 = vmatpush1.msra.mxu0 %v72
    %209 = vmatprep.subr.mxu0 0.0
    %210 = vmatpush1.msra.mxu0 %v73
    %211 = vmatprep.subr.mxu0 0.0
    %212 = vmatpush1.msra.mxu0 %v74
    %213 = vmatprep.subr.mxu0 0.0
    %214 = vmatpush1.msra.mxu0 %v75
    %215 = vmatprep.subr.mxu0 0.0
    %216 = vmatpush1.msra.mxu0 %v76
    %217 = vmatprep.subr.mxu0 0.0
    %218 = vmatpush1.msra.mxu0 %v77
    %219 = vmatprep.subr.mxu0 0.0
    %220 = vmatpush1.msra.mxu0 %v78
    %221 = vmatprep.subr.mxu0 0.0
    %222 = vmatpush1.msra.mxu0 %v79
    %223 = vmatprep.subr.mxu0 0.0
    %224 = vmatpush1.msra.mxu0 %v80
    %225 = vmatprep.subr.mxu0 0.0
    %226 = vmatpush1.msra.mxu0 %v81
    %227 = vmatprep.subr.mxu0 0.0
    %228 = vmatpush1.msra.mxu0 %v82
    %229 = vmatprep.subr.mxu0 0.0
    %230 = vmatpush1.msra.mxu0 %v83
    %231 = vmatprep.subr.mxu0 0.0
    %232 = vmatpush1.msra.mxu0 %v84
    %233 = vmatprep.subr.mxu0 0.0
    %234 = vmatpush1.msra.mxu0 %v85
    %235 = vmatprep.subr.mxu0 0.0
    %236 = vmatpush1.msra.mxu0 %v86
    %237 = vmatprep.subr.mxu0 0.0
    %238 = vmatpush1.msra.mxu0 0.0
    %239 = vmatprep.subr.mxu0 0.0
    %240 = vmatpush1.msra.mxu0 0.0
    %241 = vmatprep.subr.mxu0 0.0
    %242 = vmatpush1.msra.mxu0 0.0
    %243 = vmatprep.subr.mxu0 0.0
    %244 = vmatpush1.msra.mxu0 0.0
    %245 = vmatprep.subr.mxu0 0.0
    %246 = vmatpush1.msra.mxu0 0.0
    %247 = vmatprep.subr.mxu0 0.0
    %248 = vmatpush1.msra.mxu0 0.0
    %249 = vmatprep.subr.mxu0 0.0
    %250 = vmatpush1.msra.mxu0 0.0
    %251 = vmatprep.subr.mxu0 0.0
    %252 = vmatpush1.msra.mxu0 0.0
    %253 = vmatprep.subr.mxu0 0.0
    %254 = vmatpush1.msra.mxu0 0.0
    %255 = vmatprep.subr.mxu0 0.0
    %256 = vmatpush1.msra.mxu0 0.0
    %257 = vmatprep.subr.mxu0 0.0
    %258 = vmatpush1.msra.mxu0 0.0
    %259 = vmatprep.subr.mxu0 0.0
    %260 = vmatpush1.msra.mxu0 0.0
    %261 = vmatprep.subr.mxu0 0.0
    %262 = vmatpush1.msra.mxu0 0.0
    %263 = vmatprep.subr.mxu0 0.0
    %264 = vmatpush1.msra.mxu0 0.0
    %265 = vmatprep.subr.mxu0 0.0
    %266 = vmatpush1.msra.mxu0 0.0
    %267 = vmatprep.subr.mxu0 0.0
    %268 = vmatpush1.msra.mxu0 0.0
    %269 = vmatprep.mubr.f32.mxu0 0.0
    %270 = vmatmul.mubr.f32.gmra.mrb[0].mxu0 %v53
    %v271 = vpop.f32.mrb[0].mxu0
    %v272 = vadd.f32 %v54, %v271
    %v273 = vpop.f32.mrb[0].mxu0
    %274 = vdwg.mxu0
    %vm275 = vcmask 64512
    %v277 = vsel %vm275, %v122, 0
    %v280 = vsel %vm275, %v123, 0
    %v283 = vsel %vm275, %v124, 0
    %v286 = vsel %vm275, %v125, 0
    %v289 = vsel %vm275, %v126, 0
    %v292 = vsel %vm275, %v127, 0
    %v295 = vsel %vm275, %v128, 0
    %v298 = vsel %vm275, %v129, 0
    %300 = vmatprep.subr.mxu0 0.0
    %301 = vmatpush1.msra.mxu0 %v272
    %302 = vmatprep.subr.mxu0 0.0
    %303 = vmatpush1.msra.mxu0 0.0
    %304 = vmatprep.subr.mxu0 0.0
    %305 = vmatpush1.msra.mxu0 0.0
    %306 = vmatprep.subr.mxu0 0.0
    %307 = vmatpush1.msra.mxu0 0.0
    %308 = vmatprep.subr.mxu0 0.0
    %309 = vmatpush1.msra.mxu0 0.0
    %310 = vmatprep.subr.mxu0 0.0
    %311 = vmatpush1.msra.mxu0 0.0
    %312 = vmatprep.subr.mxu0 0.0
    %313 = vmatpush1.msra.mxu0 0.0
    %314 = vmatprep.subr.mxu0 0.0
    %315 = vmatpush1.msra.mxu0 0.0
    %316 = vmatprep.subr.mxu0 0.0
    %317 = vmatpush1.msra.mxu0 0.0
    %318 = vmatprep.subr.mxu0 0.0
    %319 = vmatpush1.msra.mxu0 0.0
    %320 = vmatprep.subr.mxu0 0.0
    %321 = vmatpush1.msra.mxu0 0.0
    %322 = vmatprep.subr.mxu0 0.0
    %323 = vmatpush1.msra.mxu0 0.0
    %324 = vmatprep.subr.mxu0 0.0
    %325 = vmatpush1.msra.mxu0 0.0
    %326 = vmatprep.subr.mxu0 0.0
    %327 = vmatpush1.msra.mxu0 0.0
    %328 = vmatprep.subr.mxu0 0.0
    %329 = vmatpush1.msra.mxu0 0.0
    %330 = vmatprep.subr.mxu0 0.0
    %331 = vmatpush1.msra.mxu0 0.0
    %332 = vmatprep.subr.mxu0 0.0
    %333 = vmatpush1.msra.mxu0 0.0
    %334 = vmatprep.subr.mxu0 0.0
    %335 = vmatpush1.msra.mxu0 0.0
    %336 = vmatprep.subr.mxu0 0.0
    %337 = vmatpush1.msra.mxu0 0.0
    %338 = vmatprep.subr.mxu0 0.0
    %339 = vmatpush1.msra.mxu0 0.0
    %340 = vmatprep.subr.mxu0 0.0
    %341 = vmatpush1.msra.mxu0 0.0
    %342 = vmatprep.subr.mxu0 0.0
    %343 = vmatpush1.msra.mxu0 0.0
    %344 = vmatprep.subr.mxu0 0.0
    %345 = vmatpush1.msra.mxu0 0.0
    %346 = vmatprep.subr.mxu0 0.0
    %347 = vmatpush1.msra.mxu0 0.0
    %348 = vmatprep.subr.mxu0 0.0
    %349 = vmatpush1.msra.mxu0 0.0
    %350 = vmatprep.subr.mxu0 0.0
    %351 = vmatpush1.msra.mxu0 0.0
    %352 = vmatprep.subr.mxu0 0.0
    %353 = vmatpush1.msra.mxu0 0.0
    %354 = vmatprep.subr.mxu0 0.0
    %355 = vmatpush1.msra.mxu0 0.0
    %356 = vmatprep.subr.mxu0 0.0
    %357 = vmatpush1.msra.mxu0 0.0
    %358 = vmatprep.subr.mxu0 0.0
    %359 = vmatpush1.msra.mxu0 0.0
    %360 = vmatprep.subr.mxu0 0.0
    %361 = vmatpush1.msra.mxu0 0.0
    %362 = vmatprep.subr.mxu0 0.0
    %363 = vmatpush1.msra.mxu0 0.0
    %364 = vmatprep.mubr.f32.mxu0 0.0
    %365 = vmatmul.mubr.f32.gmra.mrb[0].mxu0 %v277
    %v366 = vpop.f32.mrb[0].mxu0
    %v367 = vadd.f32 0.0, %v366
    %v368 = vpop.f32.mrb[0].mxu0
    %369 = vmatprep.mubr.f32.mxu0 0.0
    %370 = vmatmul.mubr.f32.gmra.mrb[0].mxu0 %v280
    %v371 = vpop.f32.mrb[0].mxu0
    %v372 = vadd.f32 0.0, %v371
    %v373 = vpop.f32.mrb[0].mxu0
    %374 = vmatprep.mubr.f32.mxu0 0.0
    %375 = vmatmul.mubr.f32.gmra.mrb[0].mxu0 %v283
    %v376 = vpop.f32.mrb[0].mxu0
    %v377 = vadd.f32 0.0, %v376
    %v378 = vpop.f32.mrb[0].mxu0
    %379 = vmatprep.mubr.f32.mxu0 0.0
    %380 = vmatmul.mubr.f32.gmra.mrb[0].mxu0 %v286
    %v381 = vpop.f32.mrb[0].mxu0
    %v382 = vadd.f32 0.0, %v381
    %v383 = vpop.f32.mrb[0].mxu0
    %384 = vmatprep.mubr.f32.mxu0 0.0
    %385 = vmatmul.mubr.f32.gmra.mrb[0].mxu0 %v289
    %v386 = vpop.f32.mrb[0].mxu0
    %v387 = vadd.f32 0.0, %v386
    %v388 = vpop.f32.mrb[0].mxu0
    %389 = vmatprep.mubr.f32.mxu0 0.0
    %390 = vmatmul.mubr.f32.gmra.mrb[0].mxu0 %v292
    %v391 = vpop.f32.mrb[0].mxu0
    %v392 = vadd.f32 0.0, %v391
    %v393 = vpop.f32.mrb[0].mxu0
    %394 = vmatprep.mubr.f32.mxu0 0.0
    %395 = vmatmul.mubr.f32.gmra.mrb[0].mxu0 %v295
    %v396 = vpop.f32.mrb[0].mxu0
    %v397 = vadd.f32 0.0, %v396
    %v398 = vpop.f32.mrb[0].mxu0
    %399 = vmatprep.mubr.f32.mxu0 0.0
    %400 = vmatmul.mubr.f32.gmra.mrb[0].mxu0 %v298
    %v401 = vpop.f32.mrb[0].mxu0
    %v402 = vadd.f32 0.0, %v401
    %v403 = vpop.f32.mrb[0].mxu0
    %404 = vdwg.mxu0
    %v406 = vsel %vm275, %v114, 0
    %v409 = vsel %vm275, %v115, 0
    %v412 = vsel %vm275, %v116, 0
    %v415 = vsel %vm275, %v117, 0
    %v418 = vsel %vm275, %v118, 0
    %v421 = vsel %vm275, %v119, 0
    %v424 = vsel %vm275, %v120, 0
    %v427 = vsel %vm275, %v121, 0
    %429 = vmatprep.subr.mxu0 0.0
    %430 = vmatpush1.msra.mxu0 %v204
    %431 = vmatprep.subr.mxu0 0.0
    %432 = vmatpush1.msra.mxu0 0.0
    %433 = vmatprep.subr.mxu0 0.0
    %434 = vmatpush1.msra.mxu0 0.0
    %435 = vmatprep.subr.mxu0 0.0
    %436 = vmatpush1.msra.mxu0 0.0
    %437 = vmatprep.subr.mxu0 0.0
    %438 = vmatpush1.msra.mxu0 0.0
    %439 = vmatprep.subr.mxu0 0.0
    %440 = vmatpush1.msra.mxu0 0.0
    %441 = vmatprep.subr.mxu0 0.0
    %442 = vmatpush1.msra.mxu0 0.0
    %443 = vmatprep.subr.mxu0 0.0
    %444 = vmatpush1.msra.mxu0 0.0
    %445 = vmatprep.subr.mxu0 0.0
    %446 = vmatpush1.msra.mxu0 0.0
    %447 = vmatprep.subr.mxu0 0.0
    %448 = vmatpush1.msra.mxu0 0.0
    %449 = vmatprep.subr.mxu0 0.0
    %450 = vmatpush1.msra.mxu0 0.0
    %451 = vmatprep.subr.mxu0 0.0
    %452 = vmatpush1.msra.mxu0 0.0
    %453 = vmatprep.subr.mxu0 0.0
    %454 = vmatpush1.msra.mxu0 0.0
    %455 = vmatprep.subr.mxu0 0.0
    %456 = vmatpush1.msra.mxu0 0.0
    %457 = vmatprep.subr.mxu0 0.0
    %458 = vmatpush1.msra.mxu0 0.0
    %459 = vmatprep.subr.mxu0 0.0
    %460 = vmatpush1.msra.mxu0 0.0
    %461 = vmatprep.subr.mxu0 0.0
    %462 = vmatpush1.msra.mxu0 0.0
    %463 = vmatprep.subr.mxu0 0.0
    %464 = vmatpush1.msra.mxu0 0.0
    %465 = vmatprep.subr.mxu0 0.0
    %466 = vmatpush1.msra.mxu0 0.0
    %467 = vmatprep.subr.mxu0 0.0
    %468 = vmatpush1.msra.mxu0 0.0
    %469 = vmatprep.subr.mxu0 0.0
    %470 = vmatpush1.msra.mxu0 0.0
    %471 = vmatprep.subr.mxu0 0.0
    %472 = vmatpush1.msra.mxu0 0.0
    %473 = vmatprep.subr.mxu0 0.0
    %474 = vmatpush1.msra.mxu0 0.0
    %475 = vmatprep.subr.mxu0 0.0
    %476 = vmatpush1.msra.mxu0 0.0
    %477 = vmatprep.subr.mxu0 0.0
    %478 = vmatpush1.msra.mxu0 0.0
    %479 = vmatprep.subr.mxu0 0.0
    %480 = vmatpush1.msra.mxu0 0.0
    %481 = vmatprep.subr.mxu0 0.0
    %482 = vmatpush1.msra.mxu0 0.0
    %483 = vmatprep.subr.mxu0 0.0
    %484 = vmatpush1.msra.mxu0 0.0
    %485 = vmatprep.subr.mxu0 0.0
    %486 = vmatpush1.msra.mxu0 0.0
    %487 = vmatprep.subr.mxu0 0.0
    %488 = vmatpush1.msra.mxu0 0.0
    %489 = vmatprep.subr.mxu0 0.0
    %490 = vmatpush1.msra.mxu0 0.0
    %491 = vmatprep.subr.mxu0 0.0
    %492 = vmatpush1.msra.mxu0 0.0
    %493 = vmatprep.mubr.f32.mxu0 0.0
    %494 = vmatmul.mubr.f32.gmra.mrb[0].mxu0 %v406
    %v495 = vpop.f32.mrb[0].mxu0
    %v496 = vadd.f32 %v367, %v495
    %v497 = vpop.f32.mrb[0].mxu0
    %498 = vmatprep.mubr.f32.mxu0 0.0
    %499 = vmatmul.mubr.f32.gmra.mrb[0].mxu0 %v409
    %v500 = vpop.f32.mrb[0].mxu0
    %v501 = vadd.f32 %v372, %v500
    %v502 = vpop.f32.mrb[0].mxu0
    %503 = vmatprep.mubr.f32.mxu0 0.0
    %504 = vmatmul.mubr.f32.gmra.mrb[0].mxu0 %v412
    %v505 = vpop.f32.mrb[0].mxu0
    %v506 = vadd.f32 %v377, %v505
    %v507 = vpop.f32.mrb[0].mxu0
    %508 = vmatprep.mubr.f32.mxu0 0.0
    %509 = vmatmul.mubr.f32.gmra.mrb[0].mxu0 %v415
    %v510 = vpop.f32.mrb[0].mxu0
    %v511 = vadd.f32 %v382, %v510
    %v512 = vpop.f32.mrb[0].mxu0
    %513 = vmatprep.mubr.f32.mxu0 0.0
    %514 = vmatmul.mubr.f32.gmra.mrb[0].mxu0 %v418
    %v515 = vpop.f32.mrb[0].mxu0
    %v516 = vadd.f32 %v387, %v515
    %v517 = vpop.f32.mrb[0].mxu0
    %518 = vmatprep.mubr.f32.mxu0 0.0
    %519 = vmatmul.mubr.f32.gmra.mrb[0].mxu0 %v421
    %v520 = vpop.f32.mrb[0].mxu0
    %v521 = vadd.f32 %v392, %v520
    %v522 = vpop.f32.mrb[0].mxu0
    %523 = vmatprep.mubr.f32.mxu0 0.0
    %524 = vmatmul.mubr.f32.gmra.mrb[0].mxu0 %v424
    %v525 = vpop.f32.mrb[0].mxu0
    %v526 = vadd.f32 %v397, %v525
    %v527 = vpop.f32.mrb[0].mxu0
    %528 = vmatprep.mubr.f32.mxu0 0.0
    %529 = vmatmul.mubr.f32.gmra.mrb[0].mxu0 %v427
    %v530 = vpop.f32.mrb[0].mxu0
    %v531 = vadd.f32 %v402, %v530
    %v532 = vpop.f32.mrb[0].mxu0
    %533 = vdwg.mxu0
    %v535 = vlaneseq
    %v536 = vshrl.u32 %v535, 7
    %v537 = vsub.s32 0, %v536
    %v538 = vrot.slane %v87, %v537
    %v540 = vadd.f32 %v496, %v538
    %v541 = vadd.f32 %v501, %v538
    %v542 = vadd.f32 %v506, %v538
    %v543 = vadd.f32 %v511, %v538
    %v544 = vadd.f32 %v516, %v538
    %v545 = vadd.f32 %v521, %v538
    %v546 = vadd.f32 %v526, %v538
    %v547 = vadd.f32 %v531, %v538
    %v548 = vmax.f32 %v540, 0.0
    %v549 = vmax.f32 %v541, 0.0
    %v550 = vmax.f32 %v542, 0.0
    %v551 = vmax.f32 %v543, 0.0
    %v552 = vmax.f32 %v544, 0.0
    %v553 = vmax.f32 %v545, 0.0
    %v554 = vmax.f32 %v546, 0.0
    %v555 = vmax.f32 %v547, 0.0
    %v557 = vlaneseq
    %v558 = vshrl.u32 %v557, 7
    %v559 = vsub.s32 0, %v558
    %v560 = vrot.slane %v104, %v559
    %562 = vmatprep.subr.mxu0 0.0
    %563 = vmatpush1.msra.mxu0 %v88
    %564 = vmatprep.subr.mxu0 0.0
    %565 = vmatpush1.msra.mxu0 %v89
    %566 = vmatprep.subr.mxu0 0.0
    %567 = vmatpush1.msra.mxu0 %v90
    %568 = vmatprep.subr.mxu0 0.0
    %569 = vmatpush1.msra.mxu0 %v91
    %570 = vmatprep.subr.mxu0 0.0
    %571 = vmatpush1.msra.mxu0 %v92
    %572 = vmatprep.subr.mxu0 0.0
    %573 = vmatpush1.msra.mxu0 %v93
    %574 = vmatprep.subr.mxu0 0.0
    %575 = vmatpush1.msra.mxu0 %v94
    %576 = vmatprep.subr.mxu0 0.0
    %577 = vmatpush1.msra.mxu0 %v95
    %578 = vmatprep.subr.mxu0 0.0
    %579 = vmatpush1.msra.mxu0 %v96
    %580 = vmatprep.subr.mxu0 0.0
    %581 = vmatpush1.msra.mxu0 %v97
    %582 = vmatprep.subr.mxu0 0.0
    %583 = vmatpush1.msra.mxu0 %v98
    %584 = vmatprep.subr.mxu0 0.0
    %585 = vmatpush1.msra.mxu0 %v99
    %586 = vmatprep.subr.mxu0 0.0
    %587 = vmatpush1.msra.mxu0 %v100
    %588 = vmatprep.subr.mxu0 0.0
    %589 = vmatpush1.msra.mxu0 %v101
    %590 = vmatprep.subr.mxu0 0.0
    %591 = vmatpush1.msra.mxu0 %v102
    %592 = vmatprep.subr.mxu0 0.0
    %593 = vmatpush1.msra.mxu0 %v103
    %594 = vmatprep.subr.mxu0 0.0
    %595 = vmatpush1.msra.mxu0 0.0
    %596 = vmatprep.subr.mxu0 0.0
    %597 = vmatpush1.msra.mxu0 0.0
    %598 = vmatprep.subr.mxu0 0.0
    %599 = vmatpush1.msra.mxu0 0.0
    %600 = vmatprep.subr.mxu0 0.0
    %601 = vmatpush1.msra.mxu0 0.0
    %602 = vmatprep.subr.mxu0 0.0
    %603 = vmatpush1.msra.mxu0 0.0
    %604 = vmatprep.subr.mxu0 0.0
    %605 = vmatpush1.msra.mxu0 0.0
    %606 = vmatprep.subr.mxu0 0.0
    %607 = vmatpush1.msra.mxu0 0.0
    %608 = vmatprep.subr.mxu0 0.0
    %609 = vmatpush1.msra.mxu0 0.0
    %610 = vmatprep.subr.mxu0 0.0
    %611 = vmatpush1.msra.mxu0 0.0
    %612 = vmatprep.subr.mxu0 0.0
    %613 = vmatpush1.msra.mxu0 0.0
    %614 = vmatprep.subr.mxu0 0.0
    %615 = vmatpush1.msra.mxu0 0.0
    %616 = vmatprep.subr.mxu0 0.0
    %617 = vmatpush1.msra.mxu0 0.0
    %618 = vmatprep.subr.mxu0 0.0
    %619 = vmatpush1.msra.mxu0 0.0
    %620 = vmatprep.subr.mxu0 0.0
    %621 = vmatpush1.msra.mxu0 0.0
    %622 = vmatprep.subr.mxu0 0.0
    %623 = vmatpush1.msra.mxu0 0.0
    %624 = vmatprep.subr.mxu0 0.0
    %625 = vmatpush1.msra.mxu0 0.0
    %626 = vmatprep.mubr.f32.mxu0 0.0
    %627 = vmatmul.mubr.f32.gmra.mrb[0].mxu0 %v548
    %v628 = vpop.f32.mrb[0].mxu0
    %v629 = vadd.f32 %v560, %v628
    %v630 = vpop.f32.mrb[0].mxu0
    %631 = vmatprep.mubr.f32.mxu0 0.0
    %632 = vmatmul.mubr.f32.gmra.mrb[0].mxu0 %v549
    %v633 = vpop.f32.mrb[0].mxu0
    %v634 = vadd.f32 %v560, %v633
    %v635 = vpop.f32.mrb[0].mxu0
    %636 = vmatprep.mubr.f32.mxu0 0.0
    %637 = vmatmul.mubr.f32.gmra.mrb[0].mxu0 %v550
    %v638 = vpop.f32.mrb[0].mxu0
    %v639 = vadd.f32 %v560, %v638
    %v640 = vpop.f32.mrb[0].mxu0
    %641 = vmatprep.mubr.f32.mxu0 0.0
    %642 = vmatmul.mubr.f32.gmra.mrb[0].mxu0 %v551
    %v643 = vpop.f32.mrb[0].mxu0
    %v644 = vadd.f32 %v560, %v643
    %v645 = vpop.f32.mrb[0].mxu0
    %646 = vmatprep.mubr.f32.mxu0 0.0
    %647 = vmatmul.mubr.f32.gmra.mrb[0].mxu0 %v552
    %v648 = vpop.f32.mrb[0].mxu0
    %v649 = vadd.f32 %v560, %v648
    %v650 = vpop.f32.mrb[0].mxu0
    %651 = vmatprep.mubr.f32.mxu0 0.0
    %652 = vmatmul.mubr.f32.gmra.mrb[0].mxu0 %v553
    %v653 = vpop.f32.mrb[0].mxu0
    %v654 = vadd.f32 %v560, %v653
    %v655 = vpop.f32.mrb[0].mxu0
    %656 = vmatprep.mubr.f32.mxu0 0.0
    %657 = vmatmul.mubr.f32.gmra.mrb[0].mxu0 %v554
    %v658 = vpop.f32.mrb[0].mxu0
    %v659 = vadd.f32 %v560, %v658
    %v660 = vpop.f32.mrb[0].mxu0
    %661 = vmatprep.mubr.f32.mxu0 0.0
    %662 = vmatmul.mubr.f32.gmra.mrb[0].mxu0 %v555
    %v663 = vpop.f32.mrb[0].mxu0
    %v664 = vadd.f32 %v560, %v663
    %v665 = vpop.f32.mrb[0].mxu0
    %666 = vdwg.mxu0
    %v667 = vmax.f32 %v629, 0.0
    %v668 = vmax.f32 %v634, 0.0
    %v669 = vmax.f32 %v639, 0.0
    %v670 = vmax.f32 %v644, 0.0
    %v671 = vmax.f32 %v649, 0.0
    %v672 = vmax.f32 %v654, 0.0
    %v673 = vmax.f32 %v659, 0.0
    %v674 = vmax.f32 %v664, 0.0
    %v676 = vlaneseq
    %v677 = vshrl.u32 %v676, 7
    %v678 = vsub.s32 0, %v677
    %v679 = vrot.slane %v113, %v678
    %vm681 = vcmask 523264
    %v683 = vsel %vm681, %v667, 0
    %v686 = vsel %vm681, %v668, 0
    %v689 = vsel %vm681, %v669, 0
    %v692 = vsel %vm681, %v670, 0
    %v695 = vsel %vm681, %v671, 0
    %v698 = vsel %vm681, %v672, 0
    %v701 = vsel %vm681, %v673, 0
    %v704 = vsel %vm681, %v674, 0
    %706 = vmatprep.subr.mxu0 0.0
    %707 = vmatpush1.msra.mxu0 %v105
    %708 = vmatprep.subr.mxu0 0.0
    %709 = vmatpush1.msra.mxu0 %v106
    %710 = vmatprep.subr.mxu0 0.0
    %711 = vmatpush1.msra.mxu0 %v107
    %712 = vmatprep.subr.mxu0 0.0
    %713 = vmatpush1.msra.mxu0 %v108
    %714 = vmatprep.subr.mxu0 0.0
    %715 = vmatpush1.msra.mxu0 %v109
    %716 = vmatprep.subr.mxu0 0.0
    %717 = vmatpush1.msra.mxu0 %v110
    %718 = vmatprep.subr.mxu0 0.0
    %719 = vmatpush1.msra.mxu0 %v111
    %720 = vmatprep.subr.mxu0 0.0
    %721 = vmatpush1.msra.mxu0 %v112
    %722 = vmatprep.subr.mxu0 0.0
    %723 = vmatpush1.msra.mxu0 0.0
    %724 = vmatprep.subr.mxu0 0.0
    %725 = vmatpush1.msra.mxu0 0.0
    %726 = vmatprep.subr.mxu0 0.0
    %727 = vmatpush1.msra.mxu0 0.0
    %728 = vmatprep.subr.mxu0 0.0
    %729 = vmatpush1.msra.mxu0 0.0
    %730 = vmatprep.subr.mxu0 0.0
    %731 = vmatpush1.msra.mxu0 0.0
    %732 = vmatprep.subr.mxu0 0.0
    %733 = vmatpush1.msra.mxu0 0.0
    %734 = vmatprep.subr.mxu0 0.0
    %735 = vmatpush1.msra.mxu0 0.0
    %736 = vmatprep.subr.mxu0 0.0
    %737 = vmatpush1.msra.mxu0 0.0
    %738 = vmatprep.subr.mxu0 0.0
    %739 = vmatpush1.msra.mxu0 0.0
    %740 = vmatprep.subr.mxu0 0.0
    %741 = vmatpush1.msra.mxu0 0.0
    %742 = vmatprep.subr.mxu0 0.0
    %743 = vmatpush1.msra.mxu0 0.0
    %744 = vmatprep.subr.mxu0 0.0
    %745 = vmatpush1.msra.mxu0 0.0
    %746 = vmatprep.subr.mxu0 0.0
    %747 = vmatpush1.msra.mxu0 0.0
    %748 = vmatprep.subr.mxu0 0.0
    %749 = vmatpush1.msra.mxu0 0.0
    %750 = vmatprep.subr.mxu0 0.0
    %751 = vmatpush1.msra.mxu0 0.0
    %752 = vmatprep.subr.mxu0 0.0
    %753 = vmatpush1.msra.mxu0 0.0
    %754 = vmatprep.subr.mxu0 0.0
    %755 = vmatpush1.msra.mxu0 0.0
    %756 = vmatprep.subr.mxu0 0.0
    %757 = vmatpush1.msra.mxu0 0.0
    %758 = vmatprep.subr.mxu0 0.0
    %759 = vmatpush1.msra.mxu0 0.0
    %760 = vmatprep.subr.mxu0 0.0
    %761 = vmatpush1.msra.mxu0 0.0
    %762 = vmatprep.subr.mxu0 0.0
    %763 = vmatpush1.msra.mxu0 0.0
    %764 = vmatprep.subr.mxu0 0.0
    %765 = vmatpush1.msra.mxu0 0.0
    %766 = vmatprep.subr.mxu0 0.0
    %767 = vmatpush1.msra.mxu0 0.0
    %768 = vmatprep.subr.mxu0 0.0
    %769 = vmatpush1.msra.mxu0 0.0
    %770 = vmatprep.mubr.f32.mxu0 0.0
    %771 = vmatmul.mubr.f32.gmra.mrb[0].mxu0 %v683
    %v772 = vpop.f32.mrb[0].mxu0
    %v773 = vadd.f32 %v679, %v772
    %v774 = vpop.f32.mrb[0].mxu0
    %775 = vmatprep.mubr.f32.mxu0 0.0
    %776 = vmatmul.mubr.f32.gmra.mrb[0].mxu0 %v686
    %v777 = vpop.f32.mrb[0].mxu0
    %v778 = vadd.f32 %v679, %v777
    %v779 = vpop.f32.mrb[0].mxu0
    %780 = vmatprep.mubr.f32.mxu0 0.0
    %781 = vmatmul.mubr.f32.gmra.mrb[0].mxu0 %v689
    %v782 = vpop.f32.mrb[0].mxu0
    %v783 = vadd.f32 %v679, %v782
    %v784 = vpop.f32.mrb[0].mxu0
    %785 = vmatprep.mubr.f32.mxu0 0.0
    %786 = vmatmul.mubr.f32.gmra.mrb[0].mxu0 %v692
    %v787 = vpop.f32.mrb[0].mxu0
    %v788 = vadd.f32 %v679, %v787
    %v789 = vpop.f32.mrb[0].mxu0
    %790 = vmatprep.mubr.f32.mxu0 0.0
    %791 = vmatmul.mubr.f32.gmra.mrb[0].mxu0 %v695
    %v792 = vpop.f32.mrb[0].mxu0
    %v793 = vadd.f32 %v679, %v792
    %v794 = vpop.f32.mrb[0].mxu0
    %795 = vmatprep.mubr.f32.mxu0 0.0
    %796 = vmatmul.mubr.f32.gmra.mrb[0].mxu0 %v698
    %v797 = vpop.f32.mrb[0].mxu0
    %v798 = vadd.f32 %v679, %v797
    %v799 = vpop.f32.mrb[0].mxu0
    %800 = vmatprep.mubr.f32.mxu0 0.0
    %801 = vmatmul.mubr.f32.gmra.mrb[0].mxu0 %v701
    %v802 = vpop.f32.mrb[0].mxu0
    %v803 = vadd.f32 %v679, %v802
    %v804 = vpop.f32.mrb[0].mxu0
    %805 = vmatprep.mubr.f32.mxu0 0.0
    %806 = vmatmul.mubr.f32.gmra.mrb[0].mxu0 %v704
    %v807 = vpop.f32.mrb[0].mxu0
    %v808 = vadd.f32 %v679, %v807
    %v809 = vpop.f32.mrb[0].mxu0
    %810 = vdwg.mxu0
    %v811 = vxor.u32 %v773, 2147483648
    %v812 = vxor.u32 %v778, 2147483648
    %v813 = vxor.u32 %v783, 2147483648
    %v814 = vxor.u32 %v788, 2147483648
    %v815 = vxor.u32 %v793, 2147483648
    %v816 = vxor.u32 %v798, 2147483648
    %v817 = vxor.u32 %v803, 2147483648
    %v818 = vxor.u32 %v808, 2147483648
    %v819 = vmul.f32 %v811, 1.442695
    %v820 = vpow.pop %v819
    %v821 = vmul.f32 %v812, 1.442695
    %v822 = vpow.pop %v821
    %v823 = vmul.f32 %v813, 1.442695
    %v824 = vpow.pop %v823
    %v825 = vmul.f32 %v814, 1.442695
    %v826 = vpow.pop %v825
    %v827 = vmul.f32 %v815, 1.442695
    %v828 = vpow.pop %v827
    %v829 = vmul.f32 %v816, 1.442695
    %v830 = vpow.pop %v829
    %v831 = vmul.f32 %v817, 1.442695
    %v832 = vpow.pop %v831
    %v833 = vmul.f32 %v818, 1.442695
    %v834 = vpow.pop %v833
    %v835 = vadd.f32 %v820, 1.0
    %v836 = vadd.f32 %v822, 1.0
    %v837 = vadd.f32 %v824, 1.0
    %v838 = vadd.f32 %v826, 1.0
    %v839 = vadd.f32 %v828, 1.0
    %v840 = vadd.f32 %v830, 1.0
    %v841 = vadd.f32 %v832, 1.0
    %v842 = vadd.f32 %v834, 1.0
    %v843 = vrcp.pop %v835
    %v844 = vmul.f32 1.0, %v843
    %v845 = vrcp.pop %v836
    %v846 = vmul.f32 1.0, %v845
    %v847 = vrcp.pop %v837
    %v848 = vmul.f32 1.0, %v847
    %v849 = vrcp.pop %v838
    %v850 = vmul.f32 1.0, %v849
    %v851 = vrcp.pop %v839
    %v852 = vmul.f32 1.0, %v851
    %v853 = vrcp.pop %v840
    %v854 = vmul.f32 1.0, %v853
    %v855 = vrcp.pop %v841
    %v856 = vmul.f32 1.0, %v855
    %v857 = vrcp.pop %v842
    %v858 = vmul.f32 1.0, %v857
    %860 = vset.pattern.permute.xlu0 0
    %861 = vperm.xlu0 %860, %v844
    %v862 = vpop.permute.xlu0 %861
    %865 = vset.pattern.permute.xlu0 0
    %866 = vperm.xlu0 %865, %v846
    %v867 = vpop.permute.xlu0 %866
    %870 = vset.pattern.permute.xlu0 0
    %871 = vperm.xlu0 %870, %v848
    %v872 = vpop.permute.xlu0 %871
    %875 = vset.pattern.permute.xlu0 0
    %876 = vperm.xlu0 %875, %v850
    %v877 = vpop.permute.xlu0 %876
    %880 = vset.pattern.permute.xlu0 0
    %881 = vperm.xlu0 %880, %v852
    %v882 = vpop.permute.xlu0 %881
    %885 = vset.pattern.permute.xlu0 0
    %886 = vperm.xlu0 %885, %v854
    %v887 = vpop.permute.xlu0 %886
    %890 = vset.pattern.permute.xlu0 0
    %891 = vperm.xlu0 %890, %v856
    %v892 = vpop.permute.xlu0 %891
    %895 = vset.pattern.permute.xlu0 0
    %896 = vperm.xlu0 %895, %v858
    %v897 = vpop.permute.xlu0 %896
    %v899 = vmul.f32 %v862, %v122
    %v900 = vmul.f32 %v867, %v123
    %v901 = vmul.f32 %v872, %v124
    %v902 = vmul.f32 %v877, %v125
    %v903 = vmul.f32 %v882, %v126
    %v904 = vmul.f32 %v887, %v127
    %v905 = vmul.f32 %v892, %v128
    %v906 = vmul.f32 %v897, %v129
    %v908 = vsel %vm681, %v130, 0
    %910 = vmatprep.subr.mxu0 0.0
    %911 = vmatpush1.msra.mxu0 %v899
    %912 = vmatprep.subr.mxu0 0.0
    %913 = vmatpush1.msra.mxu0 %v900
    %914 = vmatprep.subr.mxu0 0.0
    %915 = vmatpush1.msra.mxu0 %v901
    %916 = vmatprep.subr.mxu0 0.0
    %917 = vmatpush1.msra.mxu0 %v902
    %918 = vmatprep.subr.mxu0 0.0
    %919 = vmatpush1.msra.mxu0 %v903
    %920 = vmatprep.subr.mxu0 0.0
    %921 = vmatpush1.msra.mxu0 %v904
    %922 = vmatprep.subr.mxu0 0.0
    %923 = vmatpush1.msra.mxu0 %v905
    %924 = vmatprep.subr.mxu0 0.0
    %925 = vmatpush1.msra.mxu0 %v906
    %926 = vmatprep.subr.mxu0 0.0
    %927 = vmatpush1.msra.mxu0 0.0
    %928 = vmatprep.subr.mxu0 0.0
    %929 = vmatpush1.msra.mxu0 0.0
    %930 = vmatprep.subr.mxu0 0.0
    %931 = vmatpush1.msra.mxu0 0.0
    %932 = vmatprep.subr.mxu0 0.0
    %933 = vmatpush1.msra.mxu0 0.0
    %934 = vmatprep.subr.mxu0 0.0
    %935 = vmatpush1.msra.mxu0 0.0
    %936 = vmatprep.subr.mxu0 0.0
    %937 = vmatpush1.msra.mxu0 0.0
    %938 = vmatprep.subr.mxu0 0.0
    %939 = vmatpush1.msra.mxu0 0.0
    %940 = vmatprep.subr.mxu0 0.0
    %941 = vmatpush1.msra.mxu0 0.0
    %942 = vmatprep.subr.mxu0 0.0
    %943 = vmatpush1.msra.mxu0 0.0
    %944 = vmatprep.subr.mxu0 0.0
    %945 = vmatpush1.msra.mxu0 0.0
    %946 = vmatprep.subr.mxu0 0.0
    %947 = vmatpush1.msra.mxu0 0.0
    %948 = vmatprep.subr.mxu0 0.0
    %949 = vmatpush1.msra.mxu0 0.0
    %950 = vmatprep.subr.mxu0 0.0
    %951 = vmatpush1.msra.mxu0 0.0
    %952 = vmatprep.subr.mxu0 0.0
    %953 = vmatpush1.msra.mxu0 0.0
    %954 = vmatprep.subr.mxu0 0.0
    %955 = vmatpush1.msra.mxu0 0.0
    %956 = vmatprep.subr.mxu0 0.0
    %957 = vmatpush1.msra.mxu0 0.0
    %958 = vmatprep.subr.mxu0 0.0
    %959 = vmatpush1.msra.mxu0 0.0
    %960 = vmatprep.subr.mxu0 0.0
    %961 = vmatpush1.msra.mxu0 0.0
    %962 = vmatprep.subr.mxu0 0.0
    %963 = vmatpush1.msra.mxu0 0.0
    %964 = vmatprep.subr.mxu0 0.0
    %965 = vmatpush1.msra.mxu0 0.0
    %966 = vmatprep.subr.mxu0 0.0
    %967 = vmatpush1.msra.mxu0 0.0
    %968 = vmatprep.subr.mxu0 0.0
    %969 = vmatpush1.msra.mxu0 0.0
    %970 = vmatprep.subr.mxu0 0.0
    %971 = vmatpush1.msra.mxu0 0.0
    %972 = vmatprep.subr.mxu0 0.0
    %973 = vmatpush1.msra.mxu0 0.0
    %974 = vmatprep.mubr.f32.mxu0 0.0
    %975 = vmatmul.mubr.f32.gmra.mrb[0].mxu0 %v908
    %v976 = vpop.f32.mrb[0].mxu0
    %v977 = vadd.f32 0.0, %v976
    %v978 = vpop.f32.mrb[0].mxu0
    %979 = vdwg.mxu0
    %v980 = vmul.f32 %v862, %v114
    %v981 = vmul.f32 %v867, %v115
    %v982 = vmul.f32 %v872, %v116
    %v983 = vmul.f32 %v877, %v117
    %v984 = vmul.f32 %v882, %v118
    %v985 = vmul.f32 %v887, %v119
    %v986 = vmul.f32 %v892, %v120
    %v987 = vmul.f32 %v897, %v121
    %v989 = vsel %vm681, %v131, 0
    %991 = vmatprep.subr.mxu0 0.0
    %992 = vmatpush1.msra.mxu0 %v980
    %993 = vmatprep.subr.mxu0 0.0
    %994 = vmatpush1.msra.mxu0 %v981
    %995 = vmatprep.subr.mxu0 0.0
    %996 = vmatpush1.msra.mxu0 %v982
    %997 = vmatprep.subr.mxu0 0.0
    %998 = vmatpush1.msra.mxu0 %v983
    %999 = vmatprep.subr.mxu0 0.0
    %1000 = vmatpush1.msra.mxu0 %v984
    %1001 = vmatprep.subr.mxu0 0.0
    %1002 = vmatpush1.msra.mxu0 %v985
    %1003 = vmatprep.subr.mxu0 0.0
    %1004 = vmatpush1.msra.mxu0 %v986
    %1005 = vmatprep.subr.mxu0 0.0
    %1006 = vmatpush1.msra.mxu0 %v987
    %1007 = vmatprep.subr.mxu0 0.0
    %1008 = vmatpush1.msra.mxu0 0.0
    %1009 = vmatprep.subr.mxu0 0.0
    %1010 = vmatpush1.msra.mxu0 0.0
    %1011 = vmatprep.subr.mxu0 0.0
    %1012 = vmatpush1.msra.mxu0 0.0
    %1013 = vmatprep.subr.mxu0 0.0
    %1014 = vmatpush1.msra.mxu0 0.0
    %1015 = vmatprep.subr.mxu0 0.0
    %1016 = vmatpush1.msra.mxu0 0.0
    %1017 = vmatprep.subr.mxu0 0.0
    %1018 = vmatpush1.msra.mxu0 0.0
    %1019 = vmatprep.subr.mxu0 0.0
    %1020 = vmatpush1.msra.mxu0 0.0
    %1021 = vmatprep.subr.mxu0 0.0
    %1022 = vmatpush1.msra.mxu0 0.0
    %1023 = vmatprep.subr.mxu0 0.0
    %1024 = vmatpush1.msra.mxu0 0.0
    %1025 = vmatprep.subr.mxu0 0.0
    %1026 = vmatpush1.msra.mxu0 0.0
    %1027 = vmatprep.subr.mxu0 0.0
    %1028 = vmatpush1.msra.mxu0 0.0
    %1029 = vmatprep.subr.mxu0 0.0
    %1030 = vmatpush1.msra.mxu0 0.0
    %1031 = vmatprep.subr.mxu0 0.0
    %1032 = vmatpush1.msra.mxu0 0.0
    %1033 = vmatprep.subr.mxu0 0.0
    %1034 = vmatpush1.msra.mxu0 0.0
    %1035 = vmatprep.subr.mxu0 0.0
    %1036 = vmatpush1.msra.mxu0 0.0
    %1037 = vmatprep.subr.mxu0 0.0
    %1038 = vmatpush1.msra.mxu0 0.0
    %1039 = vmatprep.subr.mxu0 0.0
    %1040 = vmatpush1.msra.mxu0 0.0
    %1041 = vmatprep.subr.mxu0 0.0
    %1042 = vmatpush1.msra.mxu0 0.0
    %1043 = vmatprep.subr.mxu0 0.0
    %1044 = vmatpush1.msra.mxu0 0.0
    %1045 = vmatprep.subr.mxu0 0.0
    %1046 = vmatpush1.msra.mxu0 0.0
    %1047 = vmatprep.subr.mxu0 0.0
    %1048 = vmatpush1.msra.mxu0 0.0
    %1049 = vmatprep.subr.mxu0 0.0
    %1050 = vmatpush1.msra.mxu0 0.0
    %1051 = vmatprep.subr.mxu0 0.0
    %1052 = vmatpush1.msra.mxu0 0.0
    %1053 = vmatprep.subr.mxu0 0.0
    %1054 = vmatpush1.msra.mxu0 0.0
    %1055 = vmatprep.mubr.f32.mxu0 0.0
    %1056 = vmatmul.mubr.f32.gmra.mrb[0].mxu0 %v989
    %v1057 = vpop.f32.mrb[0].mxu0
    %v1058 = vadd.f32 0.0, %v1057
    %v1059 = vpop.f32.mrb[0].mxu0
    %1060 = vdwg.mxu0
    %vm1061 = vcmp.gt.f32.partialorder %v977, 0.5
    %v1062 = vsel %vm1061, 1, 0
    %v1063 = vcvt.s32.f32 %v1062
    %v1064 = vmul.f32 %v132, %v1063
    %vm1065 = vcmp.gt.f32.partialorder %v1058, 0.5
    %v1066 = vsel %vm1065, 1, 0
    %v1067 = vcvt.s32.f32 %v1066
    %v1068 = vmul.f32 %v133, %v1067
    %v1069 = vmul.f32 %v1064, %v977
    %v1070 = vmul.f32 %v1068, %v1058
    %v1071 = vadd.f32 %v1069, %v1070
    %1072 = vst.msk [vmem:[#allocation3] sm:$0xff] %vm275, %v1071
    // Predicated region
    $region62: #{tpu_custom_call.1} parent=1 // pred_check
      _
    $region63: #{tpu_custom_call.1} parent=1 // pred_check_branch
      %1074 = sbr.rel (0) target = $region65
    $region64: #{tpu_custom_call.1} parent=1 // pred_region
      %s1076 = ssub.s32 128, 128
      %1077 = vsyncadd [#allocation4], %s1076
      %s1079 = sshll.u32 [#allocation3], 4
      %s1080 = int_to_ptr.vmem [resolvable:$true] %s1079
      %1082 = dma.vmem_to_hbm [thread:$0]  %s1080, 128, %s15, [#allocation4]
    $region65: #{tpu_custom_call.1} parent=1 // pred_fallthru
      _
    // Predicated region
    $region66: #{tpu_custom_call.1} parent=1 // pred_check
      _
    $region67: #{tpu_custom_call.1} parent=1 // pred_check_branch
      %1084 = sbr.rel (0) target = $region69
    $region68: #{tpu_custom_call.1} parent=1 // pred_region
      %1085 = dma.done [#allocation4], 128
    $region69: #{tpu_custom_call.1} parent=1 // pred_fallthru
      _
    %1086 = vsyncpa [#allocation4], 1

</llo_original>
